<compile_context>
chip_gen: v6e
topology: v6e:2x2x1
jax: 0.10.0
libtpu: 0.0.40
codegen_flags: <defaults>
</compile_context>

<pallas_src>
import functools

import jax
import jax.numpy as jnp
from jax.experimental import pallas as pl
from jax.experimental.pallas import tpu as pltpu


_VMEM_LIMIT = 48 * 1024 * 1024  # below v7x's 64 MiB physical VMEM, above defaults


def _pick_tile(total, cap=8192, align=128):
    """Largest tile <= cap that divides `total` (multiple of `align` if < total)."""
    if total <= cap:
        return total
    best = None
    t = align
    while t <= cap:
        if total % t == 0:
            best = t
        t += align
    return best if best is not None else total


# ---------------------------------------------------------------------------
# Kernel 1: fused BN1 + ReLU + Conv1x1  (+ BN2 batch-statistics accumulation)
#   grid = (N, HW // THW)           axis 0 parallel, axis 1 arbitrary (accum)
#   x_ref:      (1, Cin, THW)  f32   slice of x in native NCHW (flattened HW)
#   scale_ref:  (Cin, 1)       f32   gamma1 / sqrt(var1 + eps)
#   shift_ref:  (Cin, 1)       f32   beta1 - mean1 * scale1
#   w_ref:      (Cmid, Cin)    f32   1x1 conv weight
#   y_ref:      (1, Cmid, THW) bf16  intermediate activations (channel-major)
#   psum_ref:   (1, Cmid, 1)   f32   sum_j y[c, j]      (accumulated over j)
#   psumsq_ref: (1, Cmid, 1)   f32   sum_j y[c, j]^2    (accumulated over j)
# ---------------------------------------------------------------------------
def bn_relu_conv1x1_kernel(x_ref, scale_ref, shift_ref, w_ref,
                           y_ref, psum_ref, psumsq_ref):
    x = x_ref[0].astype(jnp.float32)                                 # (Cin, THW)
    a = jnp.maximum(x * scale_ref[...] + shift_ref[...], 0.0)        # BN1 + ReLU
    acc = jnp.dot(w_ref[...], a, preferred_element_type=jnp.float32)  # (Cmid, THW)
    y_ref[0] = acc.astype(jnp.bfloat16)

    ps = jnp.sum(acc, axis=1, keepdims=True)          # (Cmid, 1)
    pss = jnp.sum(acc * acc, axis=1, keepdims=True)   # (Cmid, 1)

    @pl.when(pl.program_id(1) == 0)
    def _():
        psum_ref[0] = ps
        psumsq_ref[0] = pss

    @pl.when(pl.program_id(1) != 0)
    def _():
        psum_ref[0] += ps
        psumsq_ref[0] += pss


# ---------------------------------------------------------------------------
# Kernel 2: fused BN2 + ReLU + Conv3x3 (padding=1), one image per grid step.
#   y_ref:     (1, Cmid, HW)   bf16
#   scale_ref: (Cmid, 1)       f32
#   shift_ref: (Cmid, 1)       f32
#   w_ref:     (3, 3*G, Cmid)  bf16  w_ref[kh, kw*G + g, c] = w2[g, c, kh, kw]
#   mask_ref:  (9, 1, HW)      f32   border-validity mask per tap
#   o_ref:     (1, G, HW)      f32   lane-dense (HW on lanes) output
# ---------------------------------------------------------------------------
def bn_relu_conv3x3_kernel(y_ref, scale_ref, shift_ref, w_ref, mask_ref, o_ref,
                           *, width):
    G = o_ref.shape[1]
    HW = o_ref.shape[2]

    a = jnp.maximum(
        y_ref[0].astype(jnp.float32) * scale_ref[...] + shift_ref[...], 0.0)
    a = a.astype(jnp.bfloat16)                                       # (Cmid, HW)

    acc = jnp.zeros((G, HW), jnp.float32)
    for dy in range(3):
        # 3 kw-taps folded into M: one (3G, Cmid) x (Cmid, HW) matmul per dy.
        p = jnp.dot(w_ref[dy], a, preferred_element_type=jnp.float32)  # (3G, HW)
        for dx in range(3):
            t = dy * 3 + dx
            s = (dy - 1) * width + (dx - 1)       # flattened spatial shift
            slab = p[dx * G:(dx + 1) * G, :]      # aligned sublane slice
            if s != 0:
                slab = pltpu.roll(slab, shift=(-s) % HW, axis=1)  # XLU lane roll
            acc = acc + slab * mask_ref[t]        # zero padded-border taps
    o_ref[0] = acc


# ---------------------------------------------------------------------------
# Wrapper
# ---------------------------------------------------------------------------
def base_dense_layer(x_nchw, w1, w2, gamma1, beta1, gamma2, beta2, eps=1e-5):
    """x_nchw: (N, Cin, H, W). w1: (128, Cin, 1, 1). w2: (G, 128, 3, 3)."""
    N, Cin, H, W = x_nchw.shape
    Cmid = w1.shape[0]          # 128
    G = w2.shape[0]             # growth_rate
    HW = H * W

    x3 = x_nchw.reshape(N, Cin, HW).astype(jnp.float32)

    # ---- BN1 batch statistics (training mode, biased variance) ----
    mean1 = jnp.mean(x3, axis=(0, 2))
    var1 = jnp.var(x3, axis=(0, 2))
    inv1 = gamma1 / jnp.sqrt(var1 + eps)
    scale1 = inv1.reshape(Cin, 1)
    shift1 = (beta1 - mean1 * inv1).reshape(Cin, 1)

    w1m = w1.reshape(Cmid, Cin).astype(jnp.float32)

    THW = _pick_tile(HW)
    nblk = HW // THW

    y, psum, psumsq = pl.pallas_call(
        bn_relu_conv1x1_kernel,
        out_shape=(
            jax.ShapeDtypeStruct((N, Cmid, HW), jnp.bfloat16),
            jax.ShapeDtypeStruct((N, Cmid, 1), jnp.float32),
            jax.ShapeDtypeStruct((N, Cmid, 1), jnp.float32),
        ),
        grid=(N, nblk),
        in_specs=[
            pl.BlockSpec((1, Cin, THW), lambda n, j: (n, 0, j)),
            pl.BlockSpec((Cin, 1), lambda n, j: (0, 0)),
            pl.BlockSpec((Cin, 1), lambda n, j: (0, 0)),
            pl.BlockSpec((Cmid, Cin), lambda n, j: (0, 0)),
        ],
        out_specs=[
            pl.BlockSpec((1, Cmid, THW), lambda n, j: (n, 0, j)),
            pl.BlockSpec((1, Cmid, 1), lambda n, j: (n, 0, 0)),
            pl.BlockSpec((1, Cmid, 1), lambda n, j: (n, 0, 0)),
        ],
        compiler_params=pltpu.CompilerParams(
            dimension_semantics=("parallel", "arbitrary"),
            vmem_limit_bytes=_VMEM_LIMIT),
    )(x3, scale1, shift1, w1m)

    # ---- BN2 statistics from fused partial sums (no extra HBM pass over y) ----
    cnt = float(N * HW)
    mean2 = jnp.sum(psum, axis=(0, 2)) / cnt
    var2 = jnp.maximum(jnp.sum(psumsq, axis=(0, 2)) / cnt - mean2 * mean2, 0.0)
    inv2 = gamma2 / jnp.sqrt(var2 + eps)
    scale2 = inv2.reshape(Cmid, 1)
    shift2 = (beta2 - mean2 * inv2).reshape(Cmid, 1)

    # 3x3 weights folded into the matmul M dim: w2f[kh, kw*G + g, c] = w2[g, c, kh, kw]
    w2f = jnp.transpose(w2, (2, 3, 0, 1)).reshape(3, 3 * G, Cmid).astype(jnp.bfloat16)

    # Border-validity masks per tap (tiny, computed once by XLA).
    hh = jnp.arange(H)
    ww = jnp.arange(W)
    masks = []
    for dy in (-1, 0, 1):
        for dx in (-1, 0, 1):
            mh = (hh + dy >= 0) & (hh + dy < H)
            mw = (ww + dx >= 0) & (ww + dx < W)
            masks.append((mh[:, None] & mw[None, :]).reshape(HW))
    mask = jnp.stack(masks).astype(jnp.float32).reshape(9, 1, HW)

    out_t = pl.pallas_call(
        functools.partial(bn_relu_conv3x3_kernel, width=W),
        out_shape=jax.ShapeDtypeStruct((N, G, HW), jnp.float32),
        grid=(N,),
        in_specs=[
            pl.BlockSpec((1, Cmid, HW), lambda n: (n, 0, 0)),
            pl.BlockSpec((Cmid, 1), lambda n: (0, 0)),
            pl.BlockSpec((Cmid, 1), lambda n: (0, 0)),
            pl.BlockSpec((3, 3 * G, Cmid), lambda n: (0, 0, 0)),
            pl.BlockSpec((9, 1, HW), lambda n: (0, 0, 0)),
        ],
        out_specs=pl.BlockSpec((1, G, HW), lambda n: (n, 0, 0)),
        compiler_params=pltpu.CompilerParams(
            dimension_semantics=("parallel",),
            vmem_limit_bytes=_VMEM_LIMIT),
    )(y, scale2, shift2, w2f, mask)

    # Final concat in native NCHW layout (no transposes needed).
    return jnp.concatenate([x3, out_t], axis=1).reshape(N, Cin + G, H, W)


# ---------------------------------------------------------------------------
# Pure-JAX reference (silent sanity check)
# ---------------------------------------------------------------------------
def reference(x_nchw, w1, w2, gamma1, beta1, gamma2, beta2, eps=1e-5):
    def bn_relu(x, g, b):
        m = jnp.mean(x, axis=(0, 2, 3), keepdims=True)
        v = jnp.var(x, axis=(0, 2, 3), keepdims=True)
        xh = (x - m) / jnp.sqrt(v + eps)
        return jnp.maximum(xh * g[None, :, None, None] + b[None, :, None, None], 0.0)

    dn = ("NCHW", "OIHW", "NCHW")
    a = bn_relu(x_nchw.astype(jnp.float32), gamma1, beta1)
    y = jax.lax.conv_general_dilated(a, w1, (1, 1), "VALID", dimension_numbers=dn)
    a2 = bn_relu(y, gamma2, beta2)
    out = jax.lax.conv_general_dilated(a2, w2, (1, 1), ((1, 1), (1, 1)),
                                       dimension_numbers=dn)
    return jnp.concatenate([x_nchw.astype(jnp.float32), out], axis=1)


def xavier_uniform(key, shape):
    # shape = (out_ch, in_ch, kh, kw); gain = 1 (matches nn.init.xavier_uniform)
    fan_in = shape[1] * shape[2] * shape[3]
    fan_out = shape[0] * shape[2] * shape[3]
    bound = jnp.sqrt(6.0 / (fan_in + fan_out))
    return jax.random.uniform(key, shape, jnp.float32, -bound, bound)


if __name__ == "__main__":
    # Small shapes consistent with the module.
    N, Cin, H, W = 2, 4, 16, 16
    growth_rate = 32

    key = jax.random.PRNGKey(0)
    kx, k1, k2 = jax.random.split(key, 3)

    x = jax.random.normal(kx, (N, Cin, H, W), jnp.float32)
    w1 = xavier_uniform(k1, (128, Cin, 1, 1))
    w2 = xavier_uniform(k2, (growth_rate, 128, 3, 3))
    gamma1 = jnp.ones((Cin,), jnp.float32)
    beta1 = jnp.zeros((Cin,), jnp.float32)
    gamma2 = jnp.ones((128,), jnp.float32)
    beta2 = jnp.zeros((128,), jnp.float32)

    fwd = jax.jit(base_dense_layer)
    out = jax.block_until_ready(fwd(x, w1, w2, gamma1, beta1, gamma2, beta2))

    assert out.shape == (N, Cin + growth_rate, H, W), out.shape

    ref = jax.block_until_ready(reference(x, w1, w2, gamma1, beta1, gamma2, beta2))
    max_err = float(jnp.max(jnp.abs(out - ref)))
    # bf16 matmul operands / bf16 intermediate y -> loosened tolerance vs f32 ref.
    assert jnp.allclose(out, ref, atol=5e-2, rtol=5e-2), max_err

    print("KERNEL_OK")
</pallas_src>

<mosaic_0001>
module attributes {stable_mosaic.version = 11 : i64} {
  func.func @bn_relu_conv1x1_kernel(%arg0: i32, %arg1: i32, %arg2: memref<1x4x256xf32, #tpu.memory_space<vmem>>, %arg3: memref<4x1xf32, #tpu.memory_space<vmem>>, %arg4: memref<4x1xf32, #tpu.memory_space<vmem>>, %arg5: memref<128x4xf32, #tpu.memory_space<vmem>>, %arg6: memref<1x128x256xbf16, #tpu.memory_space<vmem>>, %arg7: memref<1x128x1xf32, #tpu.memory_space<vmem>>, %arg8: memref<1x128x1xf32, #tpu.memory_space<vmem>>) attributes {dimension_semantics = [#tpu.dimension_semantics<parallel>, #tpu.dimension_semantics<arbitrary>], iteration_bounds = array<i64: 2, 1>, scalar_prefetch = 0 : i64, scratch_operands = 0 : i64, tpu.core_type = #tpu.core_type<tc>, window_params = [{transform_indices = @transform_0, window_bounds = array<i64: 1, 4, 256>}, {pipeline_mode = #tpu.pipeline_mode<synchronous>, transform_indices = @transform_1, window_bounds = array<i64: 4, 1>}, {pipeline_mode = #tpu.pipeline_mode<synchronous>, transform_indices = @transform_2, window_bounds = array<i64: 4, 1>}, {pipeline_mode = #tpu.pipeline_mode<synchronous>, transform_indices = @transform_3, window_bounds = array<i64: 128, 4>}, {transform_indices = @transform_4, window_bounds = array<i64: 1, 128, 256>}, {transform_indices = @transform_5, window_bounds = array<i64: 1, 128, 1>}, {transform_indices = @transform_6, window_bounds = array<i64: 1, 128, 1>}]} {
    %c0 = arith.constant 0 : index
    %c0_0 = arith.constant 0 : index
    %c0_1 = arith.constant 0 : index
    %0 = vector.load %arg2[%c0, %c0_0, %c0_1] : memref<1x4x256xf32, #tpu.memory_space<vmem>>, vector<1x4x256xf32>
    %1 = vector.shape_cast %0 : vector<1x4x256xf32> to vector<4x256xf32>
    %c0_2 = arith.constant 0 : index
    %c0_3 = arith.constant 0 : index
    %2 = vector.load %arg3[%c0_2, %c0_3] : memref<4x1xf32, #tpu.memory_space<vmem>>, vector<4x1xf32>
    %3 = vector.broadcast %2 : vector<4x1xf32> to vector<4x256xf32>
    %4 = arith.mulf %1, %3 : vector<4x256xf32>
    %c0_4 = arith.constant 0 : index
    %c0_5 = arith.constant 0 : index
    %5 = vector.load %arg4[%c0_4, %c0_5] : memref<4x1xf32, #tpu.memory_space<vmem>>, vector<4x1xf32>
    %6 = vector.broadcast %5 : vector<4x1xf32> to vector<4x256xf32>
    %7 = arith.addf %4, %6 : vector<4x256xf32>
    %cst = arith.constant 0.000000e+00 : f32
    %8 = vector.broadcast %cst : f32 to vector<4x256xf32>
    %9 = arith.maximumf %7, %8 : vector<4x256xf32>
    %c0_6 = arith.constant 0 : index
    %c0_7 = arith.constant 0 : index
    %10 = vector.load %arg5[%c0_6, %c0_7] : memref<128x4xf32, #tpu.memory_space<vmem>>, vector<128x4xf32>
    %cst_8 = arith.constant dense<0.000000e+00> : vector<128x256xf32>
    %11 = tpu.matmul %10, %9, %cst_8 {dimension_numbers = #tpu.dot_dimension_numbers<[1], [0], [0], [1], [0, 0, 1, 1], [], []>} : vector<128x4xf32>, vector<4x256xf32>, vector<128x256xf32> -> vector<128x256xf32>
    %12 = arith.truncf %11 : vector<128x256xf32> to vector<128x256xbf16>
    %c0_9 = arith.constant 0 : index
    %c0_10 = arith.constant 0 : index
    %c0_11 = arith.constant 0 : index
    %13 = vector.load %arg6[%c0_9, %c0_10, %c0_11] : memref<1x128x256xbf16, #tpu.memory_space<vmem>>, vector<1x128x256xbf16>
    %14 = vector.shape_cast %13 : vector<1x128x256xbf16> to vector<128x256xbf16>
    %15 = vector.shape_cast %12 : vector<128x256xbf16> to vector<1x128x256xbf16>
    tpu.vector_store %arg6[%c0_9, %c0_10, %c0_11], %15 {strides = array<i32>} : memref<1x128x256xbf16, #tpu.memory_space<vmem>>, vector<1x128x256xbf16>,
    %cst_12 = arith.constant dense<0.000000e+00> : vector<128xf32>
    %16 = vector.multi_reduction <add>, %11, %cst_12 [1] : vector<128x256xf32> to vector<128xf32>
    %17 = vector.shape_cast %16 : vector<128xf32> to vector<128x1xf32>
    %18 = arith.mulf %11, %11 : vector<128x256xf32>
    %cst_13 = arith.constant dense<0.000000e+00> : vector<128xf32>
    %19 = vector.multi_reduction <add>, %18, %cst_13 [1] : vector<128x256xf32> to vector<128xf32>
    %20 = vector.shape_cast %19 : vector<128xf32> to vector<128x1xf32>
    %c0_i32 = arith.constant 0 : i32
    %21 = arith.cmpi eq, %arg1, %c0_i32 : i32
    %22 = arith.extui %21 : i1 to i32
    %c0_i32_14 = arith.constant 0 : i32
    %23 = arith.cmpi ne, %22, %c0_i32_14 : i32
    scf.if %23 {
      %c0_17 = arith.constant 0 : index
      %c0_18 = arith.constant 0 : index
      %c0_19 = arith.constant 0 : index
      %27 = vector.load %arg7[%c0_17, %c0_18, %c0_19] : memref<1x128x1xf32, #tpu.memory_space<vmem>>, vector<1x128x1xf32>
      %28 = vector.shape_cast %27 : vector<1x128x1xf32> to vector<128x1xf32>
      %29 = vector.shape_cast %17 : vector<128x1xf32> to vector<1x128x1xf32>
      tpu.vector_store %arg7[%c0_17, %c0_18, %c0_19], %29 {strides = array<i32>} : memref<1x128x1xf32, #tpu.memory_space<vmem>>, vector<1x128x1xf32>,
      %c0_20 = arith.constant 0 : index
      %c0_21 = arith.constant 0 : index
      %c0_22 = arith.constant 0 : index
      %30 = vector.load %arg8[%c0_20, %c0_21, %c0_22] : memref<1x128x1xf32, #tpu.memory_space<vmem>>, vector<1x128x1xf32>
      %31 = vector.shape_cast %30 : vector<1x128x1xf32> to vector<128x1xf32>
      %32 = vector.shape_cast %20 : vector<128x1xf32> to vector<1x128x1xf32>
      tpu.vector_store %arg8[%c0_20, %c0_21, %c0_22], %32 {strides = array<i32>} : memref<1x128x1xf32, #tpu.memory_space<vmem>>, vector<1x128x1xf32>,
    } else {
    }
    %c0_i32_15 = arith.constant 0 : i32
    %24 = arith.cmpi ne, %arg1, %c0_i32_15 : i32
    %25 = arith.extui %24 : i1 to i32
    %c0_i32_16 = arith.constant 0 : i32
    %26 = arith.cmpi ne, %25, %c0_i32_16 : i32
    scf.if %26 {
      %c0_17 = arith.constant 0 : index
      %c0_18 = arith.constant 0 : index
      %c0_19 = arith.constant 0 : index
      %27 = vector.load %arg7[%c0_17, %c0_18, %c0_19] : memref<1x128x1xf32, #tpu.memory_space<vmem>>, vector<1x128x1xf32>
      %28 = vector.shape_cast %27 : vector<1x128x1xf32> to vector<128x1xf32>
      %29 = arith.addf %28, %17 : vector<128x1xf32>
      %c0_20 = arith.constant 0 : index
      %c0_21 = arith.constant 0 : index
      %c0_22 = arith.constant 0 : index
      %30 = vector.load %arg7[%c0_20, %c0_21, %c0_22] : memref<1x128x1xf32, #tpu.memory_space<vmem>>, vector<1x128x1xf32>
      %31 = vector.shape_cast %30 : vector<1x128x1xf32> to vector<128x1xf32>
      %32 = vector.shape_cast %29 : vector<128x1xf32> to vector<1x128x1xf32>
      tpu.vector_store %arg7[%c0_20, %c0_21, %c0_22], %32 {strides = array<i32>} : memref<1x128x1xf32, #tpu.memory_space<vmem>>, vector<1x128x1xf32>,
      %c0_23 = arith.constant 0 : index
      %c0_24 = arith.constant 0 : index
      %c0_25 = arith.constant 0 : index
      %33 = vector.load %arg8[%c0_23, %c0_24, %c0_25] : memref<1x128x1xf32, #tpu.memory_space<vmem>>, vector<1x128x1xf32>
      %34 = vector.shape_cast %33 : vector<1x128x1xf32> to vector<128x1xf32>
      %35 = arith.addf %34, %20 : vector<128x1xf32>
      %c0_26 = arith.constant 0 : index
      %c0_27 = arith.constant 0 : index
      %c0_28 = arith.constant 0 : index
      %36 = vector.load %arg8[%c0_26, %c0_27, %c0_28] : memref<1x128x1xf32, #tpu.memory_space<vmem>>, vector<1x128x1xf32>
      %37 = vector.shape_cast %36 : vector<1x128x1xf32> to vector<128x1xf32>
      %38 = vector.shape_cast %35 : vector<128x1xf32> to vector<1x128x1xf32>
      tpu.vector_store %arg8[%c0_26, %c0_27, %c0_28], %38 {strides = array<i32>} : memref<1x128x1xf32, #tpu.memory_space<vmem>>, vector<1x128x1xf32>,
    } else {
    }
    return
  }
  func.func @transform_0(%arg0: i32, %arg1: i32) -> (i32, i32, i32) {
    %c0_i32 = arith.constant 0 : i32
    %c0_i32_0 = arith.constant 0 : i32
    return %arg0, %c0_i32, %arg1 : i32, i32, i32
  }
  func.func @transform_1(%arg0: i32, %arg1: i32) -> (i32, i32) {
    %c0_i32 = arith.constant 0 : i32
    %c0_i32_0 = arith.constant 0 : i32
    %c0_i32_1 = arith.constant 0 : i32
    return %c0_i32, %c0_i32_0 : i32, i32
  }
  func.func @transform_2(%arg0: i32, %arg1: i32) -> (i32, i32) {
    %c0_i32 = arith.constant 0 : i32
    %c0_i32_0 = arith.constant 0 : i32
    %c0_i32_1 = arith.constant 0 : i32
    return %c0_i32, %c0_i32_0 : i32, i32
  }
  func.func @transform_3(%arg0: i32, %arg1: i32) -> (i32, i32) {
    %c0_i32 = arith.constant 0 : i32
    %c0_i32_0 = arith.constant 0 : i32
    %c0_i32_1 = arith.constant 0 : i32
    return %c0_i32, %c0_i32_0 : i32, i32
  }
  func.func @transform_4(%arg0: i32, %arg1: i32) -> (i32, i32, i32) {
    %c0_i32 = arith.constant 0 : i32
    %c0_i32_0 = arith.constant 0 : i32
    return %arg0, %c0_i32, %arg1 : i32, i32, i32
  }
  func.func @transform_5(%arg0: i32, %arg1: i32) -> (i32, i32, i32) {
    %c0_i32 = arith.constant 0 : i32
    %c0_i32_0 = arith.constant 0 : i32
    %c0_i32_1 = arith.constant 0 : i32
    return %arg0, %c0_i32, %c0_i32_0 : i32, i32, i32
  }
  func.func @transform_6(%arg0: i32, %arg1: i32) -> (i32, i32, i32) {
    %c0_i32 = arith.constant 0 : i32
    %c0_i32_0 = arith.constant 0 : i32
    %c0_i32_1 = arith.constant 0 : i32
    return %arg0, %c0_i32, %c0_i32_0 : i32, i32, i32
  }
}

module attributes {stable_mosaic.version = 11 : i64} {
  func.func @bn_relu_conv3x3_kernel(%arg0: i32, %arg1: memref<1x128x256xbf16, #tpu.memory_space<vmem>>, %arg2: memref<128x1xf32, #tpu.memory_space<vmem>>, %arg3: memref<128x1xf32, #tpu.memory_space<vmem>>, %arg4: memref<3x96x128xbf16, #tpu.memory_space<vmem>>, %arg5: memref<9x1x256xf32, #tpu.memory_space<vmem>>, %arg6: memref<1x32x256xf32, #tpu.memory_space<vmem>>) attributes {dimension_semantics = [#tpu.dimension_semantics<parallel>], iteration_bounds = array<i64: 2>, scalar_prefetch = 0 : i64, scratch_operands = 0 : i64, tpu.core_type = #tpu.core_type<tc>, window_params = [{transform_indices = @transform_0, window_bounds = array<i64: 1, 128, 256>}, {pipeline_mode = #tpu.pipeline_mode<synchronous>, transform_indices = @transform_1, window_bounds = array<i64: 128, 1>}, {pipeline_mode = #tpu.pipeline_mode<synchronous>, transform_indices = @transform_2, window_bounds = array<i64: 128, 1>}, {pipeline_mode = #tpu.pipeline_mode<synchronous>, transform_indices = @transform_3, window_bounds = array<i64: 3, 96, 128>}, {pipeline_mode = #tpu.pipeline_mode<synchronous>, transform_indices = @transform_4, window_bounds = array<i64: 9, 1, 256>}, {transform_indices = @transform_5, window_bounds = array<i64: 1, 32, 256>}]} {
    %c0 = arith.constant 0 : index
    %c0_0 = arith.constant 0 : index
    %c0_1 = arith.constant 0 : index
    %0 = vector.load %arg1[%c0, %c0_0, %c0_1] : memref<1x128x256xbf16, #tpu.memory_space<vmem>>, vector<1x128x256xbf16>
    %1 = vector.shape_cast %0 : vector<1x128x256xbf16> to vector<128x256xbf16>
    %2 = arith.extf %1 : vector<128x256xbf16> to vector<128x256xf32>
    %c0_2 = arith.constant 0 : index
    %c0_3 = arith.constant 0 : index
    %3 = vector.load %arg2[%c0_2, %c0_3] : memref<128x1xf32, #tpu.memory_space<vmem>>, vector<128x1xf32>
    %4 = vector.broadcast %3 : vector<128x1xf32> to vector<128x256xf32>
    %5 = arith.mulf %2, %4 : vector<128x256xf32>
    %c0_4 = arith.constant 0 : index
    %c0_5 = arith.constant 0 : index
    %6 = vector.load %arg3[%c0_4, %c0_5] : memref<128x1xf32, #tpu.memory_space<vmem>>, vector<128x1xf32>
    %7 = vector.broadcast %6 : vector<128x1xf32> to vector<128x256xf32>
    %8 = arith.addf %5, %7 : vector<128x256xf32>
    %cst = arith.constant 0.000000e+00 : f32
    %9 = vector.broadcast %cst : f32 to vector<128x256xf32>
    %10 = arith.maximumf %8, %9 : vector<128x256xf32>
    %11 = arith.truncf %10 : vector<128x256xf32> to vector<128x256xbf16>
    %cst_6 = arith.constant 0.000000e+00 : f32
    %12 = vector.broadcast %cst_6 : f32 to vector<32x256xf32>
    %c0_7 = arith.constant 0 : index
    %c0_8 = arith.constant 0 : index
    %c0_9 = arith.constant 0 : index
    %13 = vector.load %arg4[%c0_7, %c0_8, %c0_9] : memref<3x96x128xbf16, #tpu.memory_space<vmem>>, vector<1x96x128xbf16>
    %14 = vector.shape_cast %13 : vector<1x96x128xbf16> to vector<96x128xbf16>
    %cst_10 = arith.constant dense<0.000000e+00> : vector<96x256xf32>
    %15 = tpu.matmul %14, %11, %cst_10 {dimension_numbers = #tpu.dot_dimension_numbers<[1], [0], [0], [1], [0, 0, 1, 1], [], []>} : vector<96x128xbf16>, vector<128x256xbf16>, vector<96x256xf32> -> vector<96x256xf32>
    %16 = vector.extract_strided_slice %15 {offsets = [0, 0], sizes = [32, 256], strides = [1, 1]} : vector<96x256xf32> to vector<32x256xf32>
    %c17_i32 = arith.constant 17 : i32
    %17 = tpu.dynamic_rotate %16 by %c17_i32 dim 1 : vector<32x256xf32>, i32 -> vector<32x256xf32>
    %c0_11 = arith.constant 0 : index
    %c0_12 = arith.constant 0 : index
    %c0_13 = arith.constant 0 : index
    %18 = vector.load %arg5[%c0_11, %c0_12, %c0_13] : memref<9x1x256xf32, #tpu.memory_space<vmem>>, vector<1x1x256xf32>
    %19 = vector.shape_cast %18 : vector<1x1x256xf32> to vector<1x256xf32>
    %20 = vector.broadcast %19 : vector<1x256xf32> to vector<32x256xf32>
    %21 = arith.mulf %17, %20 : vector<32x256xf32>
    %22 = arith.addf %12, %21 : vector<32x256xf32>
    %23 = vector.extract_strided_slice %15 {offsets = [32, 0], sizes = [32, 256], strides = [1, 1]} : vector<96x256xf32> to vector<32x256xf32>
    %c16_i32 = arith.constant 16 : i32
    %24 = tpu.dynamic_rotate %23 by %c16_i32 dim 1 : vector<32x256xf32>, i32 -> vector<32x256xf32>
    %c1 = arith.constant 1 : index
    %c0_14 = arith.constant 0 : index
    %c0_15 = arith.constant 0 : index
    %25 = vector.load %arg5[%c1, %c0_14, %c0_15] : memref<9x1x256xf32, #tpu.memory_space<vmem>>, vector<1x1x256xf32>
    %26 = vector.shape_cast %25 : vector<1x1x256xf32> to vector<1x256xf32>
    %27 = vector.broadcast %26 : vector<1x256xf32> to vector<32x256xf32>
    %28 = arith.mulf %24, %27 : vector<32x256xf32>
    %29 = arith.addf %22, %28 : vector<32x256xf32>
    %30 = vector.extract_strided_slice %15 {offsets = [64, 0], sizes = [32, 256], strides = [1, 1]} : vector<96x256xf32> to vector<32x256xf32>
    %c15_i32 = arith.constant 15 : i32
    %31 = tpu.dynamic_rotate %30 by %c15_i32 dim 1 : vector<32x256xf32>, i32 -> vector<32x256xf32>
    %c2 = arith.constant 2 : index
    %c0_16 = arith.constant 0 : index
    %c0_17 = arith.constant 0 : index
    %32 = vector.load %arg5[%c2, %c0_16, %c0_17] : memref<9x1x256xf32, #tpu.memory_space<vmem>>, vector<1x1x256xf32>
    %33 = vector.shape_cast %32 : vector<1x1x256xf32> to vector<1x256xf32>
    %34 = vector.broadcast %33 : vector<1x256xf32> to vector<32x256xf32>
    %35 = arith.mulf %31, %34 : vector<32x256xf32>
    %36 = arith.addf %29, %35 : vector<32x256xf32>
    %c1_18 = arith.constant 1 : index
    %c0_19 = arith.constant 0 : index
    %c0_20 = arith.constant 0 : index
    %37 = vector.load %arg4[%c1_18, %c0_19, %c0_20] : memref<3x96x128xbf16, #tpu.memory_space<vmem>>, vector<1x96x128xbf16>
    %38 = vector.shape_cast %37 : vector<1x96x128xbf16> to vector<96x128xbf16>
    %cst_21 = arith.constant dense<0.000000e+00> : vector<96x256xf32>
    %39 = tpu.matmul %38, %11, %cst_21 {dimension_numbers = #tpu.dot_dimension_numbers<[1], [0], [0], [1], [0, 0, 1, 1], [], []>} : vector<96x128xbf16>, vector<128x256xbf16>, vector<96x256xf32> -> vector<96x256xf32>
    %40 = vector.extract_strided_slice %39 {offsets = [0, 0], sizes = [32, 256], strides = [1, 1]} : vector<96x256xf32> to vector<32x256xf32>
    %c1_i32 = arith.constant 1 : i32
    %41 = tpu.dynamic_rotate %40 by %c1_i32 dim 1 : vector<32x256xf32>, i32 -> vector<32x256xf32>
    %c3 = arith.constant 3 : index
    %c0_22 = arith.constant 0 : index
    %c0_23 = arith.constant 0 : index
    %42 = vector.load %arg5[%c3, %c0_22, %c0_23] : memref<9x1x256xf32, #tpu.memory_space<vmem>>, vector<1x1x256xf32>
    %43 = vector.shape_cast %42 : vector<1x1x256xf32> to vector<1x256xf32>
    %44 = vector.broadcast %43 : vector<1x256xf32> to vector<32x256xf32>
    %45 = arith.mulf %41, %44 : vector<32x256xf32>
    %46 = arith.addf %36, %45 : vector<32x256xf32>
    %47 = vector.extract_strided_slice %39 {offsets = [32, 0], sizes = [32, 256], strides = [1, 1]} : vector<96x256xf32> to vector<32x256xf32>
    %c4 = arith.constant 4 : index
    %c0_24 = arith.constant 0 : index
    %c0_25 = arith.constant 0 : index
    %48 = vector.load %arg5[%c4, %c0_24, %c0_25] : memref<9x1x256xf32, #tpu.memory_space<vmem>>, vector<1x1x256xf32>
    %49 = vector.shape_cast %48 : vector<1x1x256xf32> to vector<1x256xf32>
    %50 = vector.broadcast %49 : vector<1x256xf32> to vector<32x256xf32>
    %51 = arith.mulf %47, %50 : vector<32x256xf32>
    %52 = arith.addf %46, %51 : vector<32x256xf32>
    %53 = vector.extract_strided_slice %39 {offsets = [64, 0], sizes = [32, 256], strides = [1, 1]} : vector<96x256xf32> to vector<32x256xf32>
    %c255_i32 = arith.constant 255 : i32
    %54 = tpu.dynamic_rotate %53 by %c255_i32 dim 1 : vector<32x256xf32>, i32 -> vector<32x256xf32>
    %c5 = arith.constant 5 : index
    %c0_26 = arith.constant 0 : index
    %c0_27 = arith.constant 0 : index
    %55 = vector.load %arg5[%c5, %c0_26, %c0_27] : memref<9x1x256xf32, #tpu.memory_space<vmem>>, vector<1x1x256xf32>
    %56 = vector.shape_cast %55 : vector<1x1x256xf32> to vector<1x256xf32>
    %57 = vector.broadcast %56 : vector<1x256xf32> to vector<32x256xf32>
    %58 = arith.mulf %54, %57 : vector<32x256xf32>
    %59 = arith.addf %52, %58 : vector<32x256xf32>
    %c2_28 = arith.constant 2 : index
    %c0_29 = arith.constant 0 : index
    %c0_30 = arith.constant 0 : index
    %60 = vector.load %arg4[%c2_28, %c0_29, %c0_30] : memref<3x96x128xbf16, #tpu.memory_space<vmem>>, vector<1x96x128xbf16>
    %61 = vector.shape_cast %60 : vector<1x96x128xbf16> to vector<96x128xbf16>
    %cst_31 = arith.constant dense<0.000000e+00> : vector<96x256xf32>
    %62 = tpu.matmul %61, %11, %cst_31 {dimension_numbers = #tpu.dot_dimension_numbers<[1], [0], [0], [1], [0, 0, 1, 1], [], []>} : vector<96x128xbf16>, vector<128x256xbf16>, vector<96x256xf32> -> vector<96x256xf32>
    %63 = vector.extract_strided_slice %62 {offsets = [0, 0], sizes = [32, 256], strides = [1, 1]} : vector<96x256xf32> to vector<32x256xf32>
    %c241_i32 = arith.constant 241 : i32
    %64 = tpu.dynamic_rotate %63 by %c241_i32 dim 1 : vector<32x256xf32>, i32 -> vector<32x256xf32>
    %c6 = arith.constant 6 : index
    %c0_32 = arith.constant 0 : index
    %c0_33 = arith.constant 0 : index
    %65 = vector.load %arg5[%c6, %c0_32, %c0_33] : memref<9x1x256xf32, #tpu.memory_space<vmem>>, vector<1x1x256xf32>
    %66 = vector.shape_cast %65 : vector<1x1x256xf32> to vector<1x256xf32>
    %67 = vector.broadcast %66 : vector<1x256xf32> to vector<32x256xf32>
    %68 = arith.mulf %64, %67 : vector<32x256xf32>
    %69 = arith.addf %59, %68 : vector<32x256xf32>
    %70 = vector.extract_strided_slice %62 {offsets = [32, 0], sizes = [32, 256], strides = [1, 1]} : vector<96x256xf32> to vector<32x256xf32>
    %c240_i32 = arith.constant 240 : i32
    %71 = tpu.dynamic_rotate %70 by %c240_i32 dim 1 : vector<32x256xf32>, i32 -> vector<32x256xf32>
    %c7 = arith.constant 7 : index
    %c0_34 = arith.constant 0 : index
    %c0_35 = arith.constant 0 : index
    %72 = vector.load %arg5[%c7, %c0_34, %c0_35] : memref<9x1x256xf32, #tpu.memory_space<vmem>>, vector<1x1x256xf32>
    %73 = vector.shape_cast %72 : vector<1x1x256xf32> to vector<1x256xf32>
    %74 = vector.broadcast %73 : vector<1x256xf32> to vector<32x256xf32>
    %75 = arith.mulf %71, %74 : vector<32x256xf32>
    %76 = arith.addf %69, %75 : vector<32x256xf32>
    %77 = vector.extract_strided_slice %62 {offsets = [64, 0], sizes = [32, 256], strides = [1, 1]} : vector<96x256xf32> to vector<32x256xf32>
    %c239_i32 = arith.constant 239 : i32
    %78 = tpu.dynamic_rotate %77 by %c239_i32 dim 1 : vector<32x256xf32>, i32 -> vector<32x256xf32>
    %c8 = arith.constant 8 : index
    %c0_36 = arith.constant 0 : index
    %c0_37 = arith.constant 0 : index
    %79 = vector.load %arg5[%c8, %c0_36, %c0_37] : memref<9x1x256xf32, #tpu.memory_space<vmem>>, vector<1x1x256xf32>
    %80 = vector.shape_cast %79 : vector<1x1x256xf32> to vector<1x256xf32>
    %81 = vector.broadcast %80 : vector<1x256xf32> to vector<32x256xf32>
    %82 = arith.mulf %78, %81 : vector<32x256xf32>
    %83 = arith.addf %76, %82 : vector<32x256xf32>
    %c0_38 = arith.constant 0 : index
    %c0_39 = arith.constant 0 : index
    %c0_40 = arith.constant 0 : index
    %84 = vector.load %arg6[%c0_38, %c0_39, %c0_40] : memref<1x32x256xf32, #tpu.memory_space<vmem>>, vector<1x32x256xf32>
    %85 = vector.shape_cast %84 : vector<1x32x256xf32> to vector<32x256xf32>
    %86 = vector.shape_cast %83 : vector<32x256xf32> to vector<1x32x256xf32>
    tpu.vector_store %arg6[%c0_38, %c0_39, %c0_40], %86 {strides = array<i32>} : memref<1x32x256xf32, #tpu.memory_space<vmem>>, vector<1x32x256xf32>,
    return
  }
  func.func @transform_0(%arg0: i32) -> (i32, i32, i32) {
    %c0_i32 = arith.constant 0 : i32
    %c0_i32_0 = arith.constant 0 : i32
    %c0_i32_1 = arith.constant 0 : i32
    return %arg0, %c0_i32, %c0_i32_0 : i32, i32, i32
  }
  func.func @transform_1(%arg0: i32) -> (i32, i32) {
    %c0_i32 = arith.constant 0 : i32
    %c0_i32_0 = arith.constant 0 : i32
    %c0_i32_1 = arith.constant 0 : i32
    return %c0_i32, %c0_i32_0 : i32, i32
  }
  func.func @transform_2(%arg0: i32) -> (i32, i32) {
    %c0_i32 = arith.constant 0 : i32
    %c0_i32_0 = arith.constant 0 : i32
    %c0_i32_1 = arith.constant 0 : i32
    return %c0_i32, %c0_i32_0 : i32, i32
  }
  func.func @transform_3(%arg0: i32) -> (i32, i32, i32) {
    %c0_i32 = arith.constant 0 : i32
    %c0_i32_0 = arith.constant 0 : i32
    %c0_i32_1 = arith.constant 0 : i32
    %c0_i32_2 = arith.constant 0 : i32
    return %c0_i32, %c0_i32_0, %c0_i32_1 : i32, i32, i32
  }
  func.func @transform_4(%arg0: i32) -> (i32, i32, i32) {
    %c0_i32 = arith.constant 0 : i32
    %c0_i32_0 = arith.constant 0 : i32
    %c0_i32_1 = arith.constant 0 : i32
    %c0_i32_2 = arith.constant 0 : i32
    return %c0_i32, %c0_i32_0, %c0_i32_1 : i32, i32, i32
  }
  func.func @transform_5(%arg0: i32) -> (i32, i32, i32) {
    %c0_i32 = arith.constant 0 : i32
    %c0_i32_0 = arith.constant 0 : i32
    %c0_i32_1 = arith.constant 0 : i32
    return %arg0, %c0_i32, %c0_i32_0 : i32, i32, i32
  }
}

</mosaic_0001>

<llo_original>
// kernel: base_dense_layer.2
$region0: #{base_dense_layer.2}
  #allocation0 [shape = 'u32[]', space=smem, size = 0x4, offset = 0x4, fixed_abs, tag = 'smem constant byte address 0x4 - core index']
  #allocation1 [shape = 'u32[144,128]{1,0:T(1,128)}', space=vmem, size = 0x12000, scoped, tag = 'internal scratch']
  %s0 = inlined_call_operand.vmem [shape: f32[2,4,256], index: 0, kind: input, shape index: {}]
  %s1 = inlined_call_operand.vmem [shape: f32[4,1], index: 1, kind: input, shape index: {}]
  %s2 = inlined_call_operand.vmem [shape: f32[4,1], index: 2, kind: input, shape index: {}]
  %s3 = inlined_call_operand.vmem [shape: f32[128,4], index: 3, kind: input, shape index: {}]
  %s4 = inlined_call_operand.vmem [shape: bf16[2,128,256], index: 4, kind: output, shape index: {0}]
  %s5 = inlined_call_operand.vmem [shape: f32[2,128,1], index: 5, kind: output, shape index: {1}]
  %s6 = inlined_call_operand.vmem [shape: f32[2,128,1], index: 6, kind: output, shape index: {2}]
  %7 = xla_tuple %s4, %s5, %s6
  %s8 = sld [smem:[#allocation0]]
  $region73: #{base_dense_layer.2} parent=0
    _
  %s10 = ssub.s32 1, %s8
  %s11 = scalar_select 0, %s10, %s8
  loop: start=0, step=1, limit=4
  $region2: #{base_dense_layer.2} parent=0 // loop_pre_header
    _
  $region3: #{base_dense_layer.2} parent=0 // loop_header
    %s13 = sphi 0, %s17
    %p14 = scmp.ge.s32.totalorder %s13, 4
    %s20 = sphi 0, %s32
    %s21 = sphi 0, %s28
    %s22 = sphi 0, %s20
    %s23 = sphi 0, %s21
    %s24 = sphi 0, %s22
    %s25 = sphi 0, %s23
    %s37 = sphi 0, %s39
    %s40 = sphi 0, %s37
    %s41 = sphi 0, %s40
    %s57 = sphi 0, %s41
    %s61 = sphi 0, %s61
    %s63 = sphi 0, %s61
    %s64 = sphi 0, %s63
    %s78 = sphi 0, %s64
    %s82 = sphi 0, %s82
    %s84 = sphi 0, %s82
    %s85 = sphi 0, %s84
    %s99 = sphi 0, %s85
    %s103 = sphi 0, %s103
    %s105 = sphi 0, %s103
    %s106 = sphi 0, %s105
    %s120 = sphi 0, %s106
    %s128 = sphi 0, %s130
    %s131 = sphi 0, %s128
    %s132 = sphi 0, %s131
    %s148 = sphi 0, %s132
    %s154 = sphi 0, %s156
    %s157 = sphi 0, %s154
    %s158 = sphi 0, %s157
    %s174 = sphi 0, %s158
    %s180 = sphi 0, %s182
    %s183 = sphi 0, %s180
    %s184 = sphi 0, %s183
    %s200 = sphi 0, %s184
  $region4: #{base_dense_layer.2} parent=0 // loop_header_branch
    %16 = sbr.rel (%p14) target = $region8
  $region5: #{base_dense_layer.2} parent=0 // loop_body
    %s18 = ssub.s32 %s13, 1
    %s19 = ssub.s32 %s13, 2
    %s26 = sadd.s32 1, %s21
    %p27 = scmp.ge.s32.totalorder %s26, 1
    %s28 = scalar_select %p27, 0, %s26
    %s29 = sadd.s32 1, %s20
    %s30 = scalar_select %p27, %s29, %s20
    %p31 = scmp.ge.s32.totalorder %s30, 2
    %s32 = scalar_select %p31, 0, %s30
    %s33 = ssub.s32 %s20, %s32
    %s34 = ssub.s32 %s21, %s28
    %s35 = sor.u32 %s33, %s34
    %p36 = scmp.eq.s32.totalorder %s35, 0
    %s38 = sadd.s32 %s37, 1
    %s39 = scalar_select %p36, %s37, %s38
    %p42 = pneg %p36
    %p43 = scmp.eq.s32.totalorder %s13, 1
    %p44 = por %p42, %p43
    %p45 = scmp.ne.s32.totalorder %s37, %s40
    %p46 = scmp.eq.s32.totalorder %s13, 0
    %p47 = por %p45, %p46
    %p48 = scmp.ne.s32.totalorder %s37, %s40
    %p49 = scmp.eq.s32.totalorder %s18, 1
    %p50 = por %p48, %p49
    %p51 = scmp.ne.s32.totalorder %s40, %s41
    %p52 = scmp.eq.s32.totalorder %s18, 0
    %p53 = por %p51, %p52
    %p54 = scmp.ne.s32.totalorder %s40, %s41
    %p55 = scmp.eq.s32.totalorder %s19, 1
    %p56 = por %p54, %p55
    %p58 = scmp.ne.s32.totalorder %s41, %s57
    %p59 = scmp.eq.s32.totalorder %s19, 0
    %p60 = por %p58, %p59
    %s62 = sadd.s32 %s61, 1
    %p65 = scmp.eq.s32.totalorder %s13, 1
    %p66 = scmp.ne.s32.totalorder %s61, %s63
    %p67 = scmp.eq.s32.totalorder %s13, 0
    %p68 = por %p66, %p67
    %p69 = scmp.ne.s32.totalorder %s61, %s63
    %p70 = scmp.eq.s32.totalorder %s18, 1
    %p71 = por %p69, %p70
    %p72 = scmp.ne.s32.totalorder %s63, %s64
    %p73 = scmp.eq.s32.totalorder %s18, 0
    %p74 = por %p72, %p73
    %p75 = scmp.ne.s32.totalorder %s63, %s64
    %p76 = scmp.eq.s32.totalorder %s19, 1
    %p77 = por %p75, %p76
    %p79 = scmp.ne.s32.totalorder %s64, %s78
    %p80 = scmp.eq.s32.totalorder %s19, 0
    %p81 = por %p79, %p80
    %s83 = sadd.s32 %s82, 1
    %p86 = scmp.eq.s32.totalorder %s13, 1
    %p87 = scmp.ne.s32.totalorder %s82, %s84
    %p88 = scmp.eq.s32.totalorder %s13, 0
    %p89 = por %p87, %p88
    %p90 = scmp.ne.s32.totalorder %s82, %s84
    %p91 = scmp.eq.s32.totalorder %s18, 1
    %p92 = por %p90, %p91
    %p93 = scmp.ne.s32.totalorder %s84, %s85
    %p94 = scmp.eq.s32.totalorder %s18, 0
    %p95 = por %p93, %p94
    %p96 = scmp.ne.s32.totalorder %s84, %s85
    %p97 = scmp.eq.s32.totalorder %s19, 1
    %p98 = por %p96, %p97
    %p100 = scmp.ne.s32.totalorder %s85, %s99
    %p101 = scmp.eq.s32.totalorder %s19, 0
    %p102 = por %p100, %p101
    %s104 = sadd.s32 %s103, 1
    %p107 = scmp.eq.s32.totalorder %s13, 1
    %p108 = scmp.ne.s32.totalorder %s103, %s105
    %p109 = scmp.eq.s32.totalorder %s13, 0
    %p110 = por %p108, %p109
    %p111 = scmp.ne.s32.totalorder %s103, %s105
    %p112 = scmp.eq.s32.totalorder %s18, 1
    %p113 = por %p111, %p112
    %p114 = scmp.ne.s32.totalorder %s105, %s106
    %p115 = scmp.eq.s32.totalorder %s18, 0
    %p116 = por %p114, %p115
    %p117 = scmp.ne.s32.totalorder %s105, %s106
    %p118 = scmp.eq.s32.totalorder %s19, 1
    %p119 = por %p117, %p118
    %p121 = scmp.ne.s32.totalorder %s106, %s120
    %p122 = scmp.eq.s32.totalorder %s19, 0
    %p123 = por %p121, %p122
    %s124 = ssub.s32 %s20, %s32
    %s125 = ssub.s32 %s21, %s28
    %s126 = sor.u32 %s124, %s125
    %p127 = scmp.eq.s32.totalorder %s126, 0
    %s129 = sadd.s32 %s128, 1
    %s130 = scalar_select %p127, %s128, %s129
    %p133 = pneg %p127
    %p134 = scmp.eq.s32.totalorder %s13, 1
    %p135 = por %p133, %p134
    %p136 = scmp.ne.s32.totalorder %s128, %s131
    %p137 = scmp.eq.s32.totalorder %s13, 0
    %p138 = por %p136, %p137
    %p139 = scmp.ne.s32.totalorder %s128, %s131
    %p140 = scmp.eq.s32.totalorder %s18, 1
    %p141 = por %p139, %p140
    %p142 = scmp.ne.s32.totalorder %s131, %s132
    %p143 = scmp.eq.s32.totalorder %s18, 0
    %p144 = por %p142, %p143
    %p145 = scmp.ne.s32.totalorder %s131, %s132
    %p146 = scmp.eq.s32.totalorder %s19, 1
    %p147 = por %p145, %p146
    %p149 = scmp.ne.s32.totalorder %s132, %s148
    %p150 = scmp.eq.s32.totalorder %s19, 0
    %p151 = por %p149, %p150
    %s152 = ssub.s32 %s20, %s32
    %p153 = scmp.eq.s32.totalorder %s152, 0
    %s155 = sadd.s32 %s154, 1
    %s156 = scalar_select %p153, %s154, %s155
    %p159 = pneg %p153
    %p160 = scmp.eq.s32.totalorder %s13, 1
    %p161 = por %p159, %p160
    %p162 = scmp.ne.s32.totalorder %s154, %s157
    %p163 = scmp.eq.s32.totalorder %s13, 0
    %p164 = por %p162, %p163
    %p165 = scmp.ne.s32.totalorder %s154, %s157
    %p166 = scmp.eq.s32.totalorder %s18, 1
    %p167 = por %p165, %p166
    %p168 = scmp.ne.s32.totalorder %s157, %s158
    %p169 = scmp.eq.s32.totalorder %s18, 0
    %p170 = por %p168, %p169
    %p171 = scmp.ne.s32.totalorder %s157, %s158
    %p172 = scmp.eq.s32.totalorder %s19, 1
    %p173 = por %p171, %p172
    %p175 = scmp.ne.s32.totalorder %s158, %s174
    %p176 = scmp.eq.s32.totalorder %s19, 0
    %p177 = por %p175, %p176
    %s178 = ssub.s32 %s20, %s32
    %p179 = scmp.eq.s32.totalorder %s178, 0
    %s181 = sadd.s32 %s180, 1
    %s182 = scalar_select %p179, %s180, %s181
    %p185 = pneg %p179
    %p186 = scmp.eq.s32.totalorder %s13, 1
    %p187 = por %p185, %p186
    %p188 = scmp.ne.s32.totalorder %s180, %s183
    %p189 = scmp.eq.s32.totalorder %s13, 0
    %p190 = por %p188, %p189
    %p191 = scmp.ne.s32.totalorder %s180, %s183
    %p192 = scmp.eq.s32.totalorder %s18, 1
    %p193 = por %p191, %p192
    %p194 = scmp.ne.s32.totalorder %s183, %s184
    %p195 = scmp.eq.s32.totalorder %s18, 0
    %p196 = por %p194, %p195
    %p197 = scmp.ne.s32.totalorder %s183, %s184
    %p198 = scmp.eq.s32.totalorder %s19, 1
    %p199 = por %p197, %p198
    %p201 = scmp.ne.s32.totalorder %s184, %s200
    %p202 = scmp.eq.s32.totalorder %s19, 0
    %p203 = por %p201, %p202
    %p204 = scmp.le.s32.totalorder 1, %s13
    %p205 = scmp.lt.s32.totalorder %s13, 3
    %p206 = pnand %p204, %p205
    %p207 = pneg %p206
    // Predicated region
    $region9: #{base_dense_layer.2} parent=5 // pred_check
      _
    $region10: #{base_dense_layer.2} parent=5 // pred_check_branch
      %209 = sbr.rel (%p206) target = $region12
    $region11: #{base_dense_layer.2} parent=5 // pred_region
      %s210 = ssub.s32 %s13, 1
      // Predicated region
      $region13: #{base_dense_layer.2} parent=11 // pred_check
        %p211 = pneg %p74
      $region14: #{base_dense_layer.2} parent=11 // pred_check_branch
        %213 = sbr.rel (%p211) target = $region16
      $region15: #{base_dense_layer.2} parent=11 // pred_region
        _
      $region16: #{base_dense_layer.2} parent=11 // pred_fallthru
        _
      // Predicated region
      $region17: #{base_dense_layer.2} parent=11 // pred_check
        %p214 = pneg %p95
      $region18: #{base_dense_layer.2} parent=11 // pred_check_branch
        %216 = sbr.rel (%p214) target = $region20
      $region19: #{base_dense_layer.2} parent=11 // pred_region
        _
      $region20: #{base_dense_layer.2} parent=11 // pred_fallthru
        _
      // Predicated region
      $region21: #{base_dense_layer.2} parent=11 // pred_check
        %p217 = pneg %p116
      $region22: #{base_dense_layer.2} parent=11 // pred_check_branch
        %219 = sbr.rel (%p217) target = $region24
      $region23: #{base_dense_layer.2} parent=11 // pred_region
        _
      $region24: #{base_dense_layer.2} parent=11 // pred_fallthru
        _
    $region12: #{base_dense_layer.2} parent=5 // pred_fallthru
      _
    %p220 = scmp.lt.s32.totalorder %s13, 2
    // Predicated region
    $region25: #{base_dense_layer.2} parent=5 // pred_check
      %p221 = pneg %p220
    $region26: #{base_dense_layer.2} parent=5 // pred_check_branch
      %223 = sbr.rel (%p221) target = $region28
    $region27: #{base_dense_layer.2} parent=5 // pred_region
      // Predicated region
      $region29: #{base_dense_layer.2} parent=27 // pred_check
        %p224 = pneg %p47
      $region30: #{base_dense_layer.2} parent=27 // pred_check_branch
        %226 = sbr.rel (%p224) target = $region32
      $region31: #{base_dense_layer.2} parent=27 // pred_region
        %s227 = smul.u32 2, %s21
        %p228 = scmp.lt.s32.totalorder %s20, 1
        %s229 = scalar_select %p228, %s20, 1
        %p230 = scmp.lt.s32.totalorder %s227, 1
        %s231 = scalar_select %p230, %s227, 1
        %s232 = smul.addr %s229, 2
        %s233 = sadd.s32 %s231, %s232
        %s234 = smul.addr %s233, 4
        %s235 = scalar_lea.vmem %s0, %s234
        %s236 = smul.u32 2, %s21
      $region32: #{base_dense_layer.2} parent=27 // pred_fallthru
        _
    $region28: #{base_dense_layer.2} parent=5 // pred_fallthru
      _
    %p237 = scmp.le.s32.totalorder 1, %s13
    %p238 = scmp.lt.s32.totalorder %s13, 3
    %p239 = pnand %p237, %p238
    %p240 = pneg %p239
    // Predicated region
    $region33: #{base_dense_layer.2} parent=5 // pred_check
      _
    $region34: #{base_dense_layer.2} parent=5 // pred_check_branch
      %242 = sbr.rel (%p239) target = $region36
    $region35: #{base_dense_layer.2} parent=5 // pred_region
      %s243 = ssub.s32 %s13, 1
      %s244 = smul.u32 2, %s23
      %p245 = scmp.lt.s32.totalorder %s22, 1
      %s246 = scalar_select %p245, %s22, 1
      %p247 = scmp.lt.s32.totalorder %s244, 1
      %s248 = scalar_select %p247, %s244, 1
      %s249 = smul.addr %s246, 2
      %s250 = sadd.s32 %s248, %s249
      %s251 = smul.addr %s250, 4
      %s252 = scalar_lea.vmem %s0, %s251
      %p253 = pneg %p53
      %p254 = pneg %p50
      %p255 = pneg %p74
      %p256 = pneg %p71
      %p257 = pneg %p95
      %p258 = pneg %p92
      %p259 = pneg %p116
      %p260 = pneg %p113
      %p261 = pneg %p144
      %p262 = pneg %p141
      %s263 = smul.u32 2, %s23
      %p264 = scmp.lt.s32.totalorder %s22, 1
      %s265 = scalar_select %p264, %s22, 1
      %p266 = scmp.lt.s32.totalorder %s263, 1
      %s267 = scalar_select %p266, %s263, 1
      %s268 = smul.addr %s265, 32
      %s269 = sadd.s32 %s267, %s268
      %s270 = smul.addr %s269, 4
      %s271 = scalar_lea.vmem %s4, %s270
      %p272 = pneg %p170
      %p273 = pneg %p167
      %p274 = scmp.lt.s32.totalorder %s22, 1
      %s275 = scalar_select %p274, %s22, 1
      %s276 = smul.addr %s275, 16
      %s277 = smul.addr %s276, 8
      %s278 = scalar_lea.vmem %s5, %s277
      %p279 = pneg %p196
      %p280 = pneg %p193
      %p281 = scmp.lt.s32.totalorder %s22, 1
      %s282 = scalar_select %p281, %s22, 1
      %s283 = smul.addr %s282, 16
      %s284 = smul.addr %s283, 8
      %s285 = scalar_lea.vmem %s6, %s284
      %s286 = smul.u32 2, %s23
      %p287 = scmp.lt.s32.totalorder %s22, 1
      %s288 = scalar_select %p287, %s22, 1
      %p289 = scmp.lt.s32.totalorder %s286, 1
      %s290 = scalar_select %p289, %s286, 1
      %s291 = smul.addr %s288, 2
      %s292 = sadd.s32 %s290, %s291
      %s293 = smul.addr %s292, 4
      %s294 = scalar_lea.vmem %s0, %s293
      %s295 = smul.u32 2, %s23
      %s296 = smul.u32 2, %s23
      %p297 = scmp.lt.s32.totalorder %s22, 1
      %s298 = scalar_select %p297, %s22, 1
      %p299 = scmp.lt.s32.totalorder %s296, 1
      %s300 = scalar_select %p299, %s296, 1
      %s301 = smul.addr %s298, 32
      %s302 = sadd.s32 %s300, %s301
      %s303 = smul.addr %s302, 4
      %s304 = scalar_lea.vmem %s4, %s303
      %s305 = smul.u32 2, %s23
      %p306 = scmp.lt.s32.totalorder %s22, 1
      %s307 = scalar_select %p306, %s22, 1
      %s308 = smul.addr %s307, 16
      %s309 = smul.addr %s308, 8
      %s310 = scalar_lea.vmem %s5, %s309
      %p311 = scmp.lt.s32.totalorder %s22, 1
      %s312 = scalar_select %p311, %s22, 1
      %s313 = smul.addr %s312, 16
      %s314 = smul.addr %s313, 8
      %s315 = scalar_lea.vmem %s6, %s314
      %v316 = vld [vmem:[%s294] sm:$0xff]
      %v317 = vld [vmem:[%s1] sm:$0xf]
      %319 = vset.pattern.permute.xlu0 0
      %320 = vperm.xlu0 %319, %v317
      %v321 = vpop.permute.xlu0 %320
      %v323 = vunpack.c.l.s4 839922192
      %v324 = vunpack.c.0.s8 %v323
      %v325 = vlaneseq
      %v326 = vshrl.u32 %v325, 7
      %v327 = vsub.s32 %v324, %v326
      %v328 = vrot.slane %v321, %v327
      %v330 = vmul.f32 %v316, %v328
      %v331 = vld [vmem:[%s2] sm:$0xf]
      %333 = vset.pattern.permute.xlu0 0
      %334 = vperm.xlu0 %333, %v331
      %v335 = vpop.permute.xlu0 %334
      %v337 = vunpack.c.l.s4 839922192
      %v338 = vunpack.c.0.s8 %v337
      %v339 = vlaneseq
      %v340 = vshrl.u32 %v339, 7
      %v341 = vsub.s32 %v338, %v340
      %v342 = vrot.slane %v335, %v341
      %v344 = vadd.f32 %v330, %v342
      %v345 = vmax.f32 %v344, 0.0
      %v346 = vld [vmem:[%s3] sm:$0xff]
      %v347 = vld [vmem:[%s3 + $0x8] sm:$0xff]
      %v348 = vld [vmem:[%s3 + $0x10] sm:$0xff]
      %v349 = vld [vmem:[%s3 + $0x18] sm:$0xff]
      %v350 = vld [vmem:[%s3 + $0x20] sm:$0xff]
      %v351 = vld [vmem:[%s3 + $0x28] sm:$0xff]
      %v352 = vld [vmem:[%s3 + $0x30] sm:$0xff]
      %v353 = vld [vmem:[%s3 + $0x38] sm:$0xff]
      %v354 = vld [vmem:[%s3 + $0x40] sm:$0xff]
      %v355 = vld [vmem:[%s3 + $0x48] sm:$0xff]
      %v356 = vld [vmem:[%s3 + $0x50] sm:$0xff]
      %v357 = vld [vmem:[%s3 + $0x58] sm:$0xff]
      %v358 = vld [vmem:[%s3 + $0x60] sm:$0xff]
      %v359 = vld [vmem:[%s3 + $0x68] sm:$0xff]
      %v360 = vld [vmem:[%s3 + $0x70] sm:$0xff]
      %v361 = vld [vmem:[%s3 + $0x78] sm:$0xff]
      %v363 = vcombine.high %v345, %v345
      %vm364 = vcmask 31744
      %v366 = vsel %vm364, %v346, 0
      %v369 = vsel %vm364, %v347, 0
      %v372 = vsel %vm364, %v348, 0
      %v375 = vsel %vm364, %v349, 0
      %v378 = vsel %vm364, %v350, 0
      %v381 = vsel %vm364, %v351, 0
      %v384 = vsel %vm364, %v352, 0
      %v387 = vsel %vm364, %v353, 0
      %v390 = vsel %vm364, %v354, 0
      %v393 = vsel %vm364, %v355, 0
      %v396 = vsel %vm364, %v356, 0
      %v399 = vsel %vm364, %v357, 0
      %v402 = vsel %vm364, %v358, 0
      %v405 = vsel %vm364, %v359, 0
      %v408 = vsel %vm364, %v360, 0
      %v411 = vsel %vm364, %v361, 0
      %vm413 = vcmask 1043456
      %v414 = vsel %vm413, %v345, 0
      %v416 = vsel %vm413, %v363, 0
      %418 = vmatprep.subr.mxu0 0.0
      %419 = vmatpush1.msra.mxu0 0.0
      %420 = vmatprep.subr.mxu0 0.0
      %421 = vmatpush1.msra.mxu0 0.0
      %422 = vmatprep.subr.mxu0 0.0
      %423 = vmatpush1.msra.mxu0 0.0
      %424 = vmatprep.subr.mxu0 0.0
      %425 = vmatpush1.msra.mxu0 0.0
      %426 = vmatprep.subr.mxu0 0.0
      %427 = vmatpush1.msra.mxu0 0.0
      %428 = vmatprep.subr.mxu0 0.0
      %429 = vmatpush1.msra.mxu0 0.0
      %430 = vmatprep.subr.mxu0 0.0
      %431 = vmatpush1.msra.mxu0 0.0
      %432 = vmatprep.subr.mxu0 0.0
      %433 = vmatpush1.msra.mxu0 0.0
      %434 = vmatprep.subr.mxu0 0.0
      %435 = vmatpush1.msra.mxu0 0.0
      %436 = vmatprep.subr.mxu0 0.0
      %437 = vmatpush1.msra.mxu0 0.0
      %438 = vmatprep.subr.mxu0 0.0
      %439 = vmatpush1.msra.mxu0 0.0
      %440 = vmatprep.subr.mxu0 0.0
      %441 = vmatpush1.msra.mxu0 0.0
      %442 = vmatprep.subr.mxu0 0.0
      %443 = vmatpush1.msra.mxu0 0.0
      %444 = vmatprep.subr.mxu0 0.0
      %445 = vmatpush1.msra.mxu0 0.0
      %446 = vmatprep.subr.mxu0 0.0
      %447 = vmatpush1.msra.mxu0 0.0
      %448 = vmatprep.subr.mxu0 %v416
      %449 = vmatpush1.msra.mxu0 %v414
      %450 = vmatprep.subr.mxu0 0.0
      %451 = vmatpush2.msra.mxu0 0.0
      %452 = vmatprep.subr.mxu0 0.0
      %453 = vmatpush2.msra.mxu0 0.0
      %454 = vmatprep.subr.mxu0 0.0
      %455 = vmatpush2.msra.mxu0 0.0
      %456 = vmatprep.subr.mxu0 0.0
      %457 = vmatpush2.msra.mxu0 0.0
      %458 = vmatprep.subr.mxu0 0.0
      %459 = vmatpush2.msra.mxu0 0.0
      %460 = vmatprep.subr.mxu0 0.0
      %461 = vmatpush2.msra.mxu0 0.0
      %462 = vmatprep.subr.mxu0 0.0
      %463 = vmatpush2.msra.mxu0 0.0
      %464 = vmatprep.subr.mxu0 0.0
      %465 = vmatpush2.msra.mxu0 0.0
      %466 = vmatprep.subr.mxu0 0.0
      %467 = vmatpush2.msra.mxu0 0.0
      %468 = vmatprep.subr.mxu0 0.0
      %469 = vmatpush2.msra.mxu0 0.0
      %470 = vmatprep.subr.mxu0 0.0
      %471 = vmatpush2.msra.mxu0 0.0
      %472 = vmatprep.subr.mxu0 0.0
      %473 = vmatpush2.msra.mxu0 0.0
      %474 = vmatprep.subr.mxu0 0.0
      %475 = vmatpush2.msra.mxu0 0.0
      %476 = vmatprep.subr.mxu0 0.0
      %477 = vmatpush2.msra.mxu0 0.0
      %478 = vmatprep.subr.mxu0 0.0
      %479 = vmatpush2.msra.mxu0 0.0
      %480 = vmatprep.subr.mxu0 0.0
      %481 = vmatpush2.msra.mxu0 0.0
      %482 = vmatprep.mubr.f32.mxu0 0.0
      %483 = vmatmul.mubr.f32.gmra.mxu0 %v366
      %v484 = vpop.f32.mrf.mxu0
      %v485 = vadd.f32 0.0, %v484
      %v486 = vpop.f32.mrf.mxu0
      %v487 = vadd.f32 0.0, %v486
      %488 = vmatprep.mubr.f32.mxu0 0.0
      %489 = vmatmul.mubr.f32.gmra.mxu0 %v369
      %v490 = vpop.f32.mrf.mxu0
      %v491 = vadd.f32 0.0, %v490
      %v492 = vpop.f32.mrf.mxu0
      %v493 = vadd.f32 0.0, %v492
      %494 = vmatprep.mubr.f32.mxu0 0.0
      %495 = vmatmul.mubr.f32.gmra.mxu0 %v372
      %v496 = vpop.f32.mrf.mxu0
      %v497 = vadd.f32 0.0, %v496
      %v498 = vpop.f32.mrf.mxu0
      %v499 = vadd.f32 0.0, %v498
      %500 = vmatprep.mubr.f32.mxu0 0.0
      %501 = vmatmul.mubr.f32.gmra.mxu0 %v375
      %v502 = vpop.f32.mrf.mxu0
      %v503 = vadd.f32 0.0, %v502
      %v504 = vpop.f32.mrf.mxu0
      %v505 = vadd.f32 0.0, %v504
      %506 = vmatprep.mubr.f32.mxu0 0.0
      %507 = vmatmul.mubr.f32.gmra.mxu0 %v378
      %v508 = vpop.f32.mrf.mxu0
      %v509 = vadd.f32 0.0, %v508
      %v510 = vpop.f32.mrf.mxu0
      %v511 = vadd.f32 0.0, %v510
      %512 = vmatprep.mubr.f32.mxu0 0.0
      %513 = vmatmul.mubr.f32.gmra.mxu0 %v381
      %v514 = vpop.f32.mrf.mxu0
      %v515 = vadd.f32 0.0, %v514
      %v516 = vpop.f32.mrf.mxu0
      %v517 = vadd.f32 0.0, %v516
      %518 = vmatprep.mubr.f32.mxu0 0.0
      %519 = vmatmul.mubr.f32.gmra.mxu0 %v384
      %v520 = vpop.f32.mrf.mxu0
      %v521 = vadd.f32 0.0, %v520
      %v522 = vpop.f32.mrf.mxu0
      %v523 = vadd.f32 0.0, %v522
      %524 = vmatprep.mubr.f32.mxu0 0.0
      %525 = vmatmul.mubr.f32.gmra.mxu0 %v387
      %v526 = vpop.f32.mrf.mxu0
      %v527 = vadd.f32 0.0, %v526
      %v528 = vpop.f32.mrf.mxu0
      %v529 = vadd.f32 0.0, %v528
      %530 = vmatprep.mubr.f32.mxu0 0.0
      %531 = vmatmul.mubr.f32.gmra.mxu0 %v390
      %v532 = vpop.f32.mrf.mxu0
      %v533 = vadd.f32 0.0, %v532
      %v534 = vpop.f32.mrf.mxu0
      %v535 = vadd.f32 0.0, %v534
      %536 = vmatprep.mubr.f32.mxu0 0.0
      %537 = vmatmul.mubr.f32.gmra.mxu0 %v393
      %v538 = vpop.f32.mrf.mxu0
      %v539 = vadd.f32 0.0, %v538
      %v540 = vpop.f32.mrf.mxu0
      %v541 = vadd.f32 0.0, %v540
      %542 = vmatprep.mubr.f32.mxu0 0.0
      %543 = vmatmul.mubr.f32.gmra.mxu0 %v396
      %v544 = vpop.f32.mrf.mxu0
      %v545 = vadd.f32 0.0, %v544
      %v546 = vpop.f32.mrf.mxu0
      %v547 = vadd.f32 0.0, %v546
      %548 = vmatprep.mubr.f32.mxu0 0.0
      %549 = vmatmul.mubr.f32.gmra.mxu0 %v399
      %v550 = vpop.f32.mrf.mxu0
      %v551 = vadd.f32 0.0, %v550
      %v552 = vpop.f32.mrf.mxu0
      %v553 = vadd.f32 0.0, %v552
      %554 = vmatprep.mubr.f32.mxu0 0.0
      %555 = vmatmul.mubr.f32.gmra.mxu0 %v402
      %v556 = vpop.f32.mrf.mxu0
      %v557 = vadd.f32 0.0, %v556
      %v558 = vpop.f32.mrf.mxu0
      %v559 = vadd.f32 0.0, %v558
      %560 = vmatprep.mubr.f32.mxu0 0.0
      %561 = vmatmul.mubr.f32.gmra.mxu0 %v405
      %v562 = vpop.f32.mrf.mxu0
      %v563 = vadd.f32 0.0, %v562
      %v564 = vpop.f32.mrf.mxu0
      %v565 = vadd.f32 0.0, %v564
      %566 = vmatprep.mubr.f32.mxu0 0.0
      %567 = vmatmul.mubr.f32.gmra.mxu0 %v408
      %v568 = vpop.f32.mrf.mxu0
      %v569 = vadd.f32 0.0, %v568
      %v570 = vpop.f32.mrf.mxu0
      %v571 = vadd.f32 0.0, %v570
      %572 = vmatprep.mubr.f32.mxu0 0.0
      %573 = vmatmul.mubr.f32.gmra.mxu0 %v411
      %v574 = vpop.f32.mrf.mxu0
      %v575 = vadd.f32 0.0, %v574
      %v576 = vpop.f32.mrf.mxu0
      %v577 = vadd.f32 0.0, %v576
      %578 = vdwg.mxu0
      %v579 = vpack.c.bf16 %v491, %v485
      %v580 = vpack.c.bf16 %v493, %v487
      %v581 = vpack.c.bf16 %v503, %v497
      %v582 = vpack.c.bf16 %v505, %v499
      %v583 = vpack.c.bf16 %v515, %v509
      %v584 = vpack.c.bf16 %v517, %v511
      %v585 = vpack.c.bf16 %v527, %v521
      %v586 = vpack.c.bf16 %v529, %v523
      %v587 = vpack.c.bf16 %v539, %v533
      %v588 = vpack.c.bf16 %v541, %v535
      %v589 = vpack.c.bf16 %v551, %v545
      %v590 = vpack.c.bf16 %v553, %v547
      %v591 = vpack.c.bf16 %v563, %v557
      %v592 = vpack.c.bf16 %v565, %v559
      %v593 = vpack.c.bf16 %v575, %v569
      %v594 = vpack.c.bf16 %v577, %v571
      %v611 = vunpack.c.l.b16 %v579
      %v612 = vunpack.c.l.b16 %v580
      %v613 = vunpack.c.h.b16 %v579
      %v614 = vunpack.c.h.b16 %v580
      %v615 = vunpack.c.l.b16 %v581
      %v616 = vunpack.c.l.b16 %v582
      %v617 = vunpack.c.h.b16 %v581
      %v618 = vunpack.c.h.b16 %v582
      %v619 = vunpack.c.l.b16 %v583
      %v620 = vunpack.c.l.b16 %v584
      %v621 = vunpack.c.h.b16 %v583
      %v622 = vunpack.c.h.b16 %v584
      %v623 = vunpack.c.l.b16 %v585
      %v624 = vunpack.c.l.b16 %v586
      %v625 = vunpack.c.h.b16 %v585
      %v626 = vunpack.c.h.b16 %v586
      %v627 = vunpack.c.l.b16 %v587
      %v628 = vunpack.c.l.b16 %v588
      %v629 = vunpack.c.h.b16 %v587
      %v630 = vunpack.c.h.b16 %v588
      %v631 = vunpack.c.l.b16 %v589
      %v632 = vunpack.c.l.b16 %v590
      %v633 = vunpack.c.h.b16 %v589
      %v634 = vunpack.c.h.b16 %v590
      %v635 = vunpack.c.l.b16 %v591
      %v636 = vunpack.c.l.b16 %v592
      %v637 = vunpack.c.h.b16 %v591
      %v638 = vunpack.c.h.b16 %v592
      %v639 = vunpack.c.l.b16 %v593
      %v640 = vunpack.c.l.b16 %v594
      %v641 = vunpack.c.h.b16 %v593
      %v642 = vunpack.c.h.b16 %v594
      %v643 = vpack.c.b16 %v612, %v611
      %v644 = vpack.c.b16 %v614, %v613
      %v645 = vpack.c.b16 %v616, %v615
      %v646 = vpack.c.b16 %v618, %v617
      %v647 = vpack.c.b16 %v620, %v619
      %v648 = vpack.c.b16 %v622, %v621
      %v649 = vpack.c.b16 %v624, %v623
      %v650 = vpack.c.b16 %v626, %v625
      %v651 = vpack.c.b16 %v628, %v627
      %v652 = vpack.c.b16 %v630, %v629
      %v653 = vpack.c.b16 %v632, %v631
      %v654 = vpack.c.b16 %v634, %v633
      %v655 = vpack.c.b16 %v636, %v635
      %v656 = vpack.c.b16 %v638, %v637
      %v657 = vpack.c.b16 %v640, %v639
      %v658 = vpack.c.b16 %v642, %v641
      %675 = vst [vmem:[%s304] sm:$0xff] %v643
      %676 = vst [vmem:[%s304 + $0x8] sm:$0xff] %v644
      %677 = vst [vmem:[%s304 + $0x10] sm:$0xff] %v645
      %678 = vst [vmem:[%s304 + $0x18] sm:$0xff] %v646
      %679 = vst [vmem:[%s304 + $0x20] sm:$0xff] %v647
      %680 = vst [vmem:[%s304 + $0x28] sm:$0xff] %v648
      %681 = vst [vmem:[%s304 + $0x30] sm:$0xff] %v649
      %682 = vst [vmem:[%s304 + $0x38] sm:$0xff] %v650
      %683 = vst [vmem:[%s304 + $0x40] sm:$0xff] %v651
      %684 = vst [vmem:[%s304 + $0x48] sm:$0xff] %v652
      %685 = vst [vmem:[%s304 + $0x50] sm:$0xff] %v653
      %686 = vst [vmem:[%s304 + $0x58] sm:$0xff] %v654
      %687 = vst [vmem:[%s304 + $0x60] sm:$0xff] %v655
      %688 = vst [vmem:[%s304 + $0x68] sm:$0xff] %v656
      %689 = vst [vmem:[%s304 + $0x70] sm:$0xff] %v657
      %690 = vst [vmem:[%s304 + $0x78] sm:$0xff] %v658
      %v691 = vadd.f32 %v485, %v487
      %692 = vadd.xlane.f32.xlu0 %v691
      %v693 = vpop.xlane.xlu0 %692
      %v694 = vadd.f32 %v491, %v493
      %695 = vadd.xlane.f32.xlu0 %v694
      %v696 = vpop.xlane.xlu0 %695
      %v697 = vadd.f32 %v497, %v499
      %698 = vadd.xlane.f32.xlu0 %v697
      %v699 = vpop.xlane.xlu0 %698
      %v700 = vadd.f32 %v503, %v505
      %701 = vadd.xlane.f32.xlu0 %v700
      %v702 = vpop.xlane.xlu0 %701
      %v703 = vadd.f32 %v509, %v511
      %704 = vadd.xlane.f32.xlu0 %v703
      %v705 = vpop.xlane.xlu0 %704
      %v706 = vadd.f32 %v515, %v517
      %707 = vadd.xlane.f32.xlu0 %v706
      %v708 = vpop.xlane.xlu0 %707
      %v709 = vadd.f32 %v521, %v523
      %710 = vadd.xlane.f32.xlu0 %v709
      %v711 = vpop.xlane.xlu0 %710
      %v712 = vadd.f32 %v527, %v529
      %713 = vadd.xlane.f32.xlu0 %v712
      %v714 = vpop.xlane.xlu0 %713
      %v715 = vadd.f32 %v533, %v535
      %716 = vadd.xlane.f32.xlu0 %v715
      %v717 = vpop.xlane.xlu0 %716
      %v718 = vadd.f32 %v539, %v541
      %719 = vadd.xlane.f32.xlu0 %v718
      %v720 = vpop.xlane.xlu0 %719
      %v721 = vadd.f32 %v545, %v547
      %722 = vadd.xlane.f32.xlu0 %v721
      %v723 = vpop.xlane.xlu0 %722
      %v724 = vadd.f32 %v551, %v553
      %725 = vadd.xlane.f32.xlu0 %v724
      %v726 = vpop.xlane.xlu0 %725
      %v727 = vadd.f32 %v557, %v559
      %728 = vadd.xlane.f32.xlu0 %v727
      %v729 = vpop.xlane.xlu0 %728
      %v730 = vadd.f32 %v563, %v565
      %731 = vadd.xlane.f32.xlu0 %v730
      %v732 = vpop.xlane.xlu0 %731
      %v733 = vadd.f32 %v569, %v571
      %734 = vadd.xlane.f32.xlu0 %v733
      %v735 = vpop.xlane.xlu0 %734
      %v736 = vadd.f32 %v575, %v577
      %737 = vadd.xlane.f32.xlu0 %v736
      %v738 = vpop.xlane.xlu0 %737
      %v739 = vmul.f32 %v485, %v485
      %v740 = vmul.f32 %v487, %v487
      %v741 = vmul.f32 %v491, %v491
      %v742 = vmul.f32 %v493, %v493
      %v743 = vmul.f32 %v497, %v497
      %v744 = vmul.f32 %v499, %v499
      %v745 = vmul.f32 %v503, %v503
      %v746 = vmul.f32 %v505, %v505
      %v747 = vmul.f32 %v509, %v509
      %v748 = vmul.f32 %v511, %v511
      %v749 = vmul.f32 %v515, %v515
      %v750 = vmul.f32 %v517, %v517
      %v751 = vmul.f32 %v521, %v521
      %v752 = vmul.f32 %v523, %v523
      %v753 = vmul.f32 %v527, %v527
      %v754 = vmul.f32 %v529, %v529
      %v755 = vmul.f32 %v533, %v533
      %v756 = vmul.f32 %v535, %v535
      %v757 = vmul.f32 %v539, %v539
      %v758 = vmul.f32 %v541, %v541
      %v759 = vmul.f32 %v545, %v545
      %v760 = vmul.f32 %v547, %v547
      %v761 = vmul.f32 %v551, %v551
      %v762 = vmul.f32 %v553, %v553
      %v763 = vmul.f32 %v557, %v557
      %v764 = vmul.f32 %v559, %v559
      %v765 = vmul.f32 %v563, %v563
      %v766 = vmul.f32 %v565, %v565
      %v767 = vmul.f32 %v569, %v569
      %v768 = vmul.f32 %v571, %v571
      %v769 = vmul.f32 %v575, %v575
      %v770 = vmul.f32 %v577, %v577
      %v771 = vadd.f32 %v739, %v740
      %772 = vadd.xlane.f32.xlu0 %v771
      %v773 = vpop.xlane.xlu0 %772
      %v774 = vadd.f32 %v741, %v742
      %775 = vadd.xlane.f32.xlu0 %v774
      %v776 = vpop.xlane.xlu0 %775
      %v777 = vadd.f32 %v743, %v744
      %778 = vadd.xlane.f32.xlu0 %v777
      %v779 = vpop.xlane.xlu0 %778
      %v780 = vadd.f32 %v745, %v746
      %781 = vadd.xlane.f32.xlu0 %v780
      %v782 = vpop.xlane.xlu0 %781
      %v783 = vadd.f32 %v747, %v748
      %784 = vadd.xlane.f32.xlu0 %v783
      %v785 = vpop.xlane.xlu0 %784
      %v786 = vadd.f32 %v749, %v750
      %787 = vadd.xlane.f32.xlu0 %v786
      %v788 = vpop.xlane.xlu0 %787
      %v789 = vadd.f32 %v751, %v752
      %790 = vadd.xlane.f32.xlu0 %v789
      %v791 = vpop.xlane.xlu0 %790
      %v792 = vadd.f32 %v753, %v754
      %793 = vadd.xlane.f32.xlu0 %v792
      %v794 = vpop.xlane.xlu0 %793
      %v795 = vadd.f32 %v755, %v756
      %796 = vadd.xlane.f32.xlu0 %v795
      %v797 = vpop.xlane.xlu0 %796
      %v798 = vadd.f32 %v757, %v758
      %799 = vadd.xlane.f32.xlu0 %v798
      %v800 = vpop.xlane.xlu0 %799
      %v801 = vadd.f32 %v759, %v760
      %802 = vadd.xlane.f32.xlu0 %v801
      %v803 = vpop.xlane.xlu0 %802
      %v804 = vadd.f32 %v761, %v762
      %805 = vadd.xlane.f32.xlu0 %v804
      %v806 = vpop.xlane.xlu0 %805
      %v807 = vadd.f32 %v763, %v764
      %808 = vadd.xlane.f32.xlu0 %v807
      %v809 = vpop.xlane.xlu0 %808
      %v810 = vadd.f32 %v765, %v766
      %811 = vadd.xlane.f32.xlu0 %v810
      %v812 = vpop.xlane.xlu0 %811
      %v813 = vadd.f32 %v767, %v768
      %814 = vadd.xlane.f32.xlu0 %v813
      %v815 = vpop.xlane.xlu0 %814
      %v816 = vadd.f32 %v769, %v770
      %817 = vadd.xlane.f32.xlu0 %v816
      %v818 = vpop.xlane.xlu0 %817
      %p819 = scmp.eq.s32.totalorder %s23, 0
      // Predicated region
      $region37: #{base_dense_layer.2} parent=35 // pred_check
        %p820 = pneg %p819
      $region38: #{base_dense_layer.2} parent=35 // pred_check_branch
        %822 = sbr.rel (%p820) target = $region40
      $region39: #{base_dense_layer.2} parent=35 // pred_region
        %vm823 = vcmask 7168
        %824 = vst.msk [vmem:[%s310] sm:$0xff] %vm823, %v693
        %825 = vst.msk [vmem:[%s310 + $0x8] sm:$0xff] %vm823, %v696
        %826 = vst.msk [vmem:[%s310 + $0x10] sm:$0xff] %vm823, %v699
        %827 = vst.msk [vmem:[%s310 + $0x18] sm:$0xff] %vm823, %v702
        %828 = vst.msk [vmem:[%s310 + $0x20] sm:$0xff] %vm823, %v705
        %829 = vst.msk [vmem:[%s310 + $0x28] sm:$0xff] %vm823, %v708
        %830 = vst.msk [vmem:[%s310 + $0x30] sm:$0xff] %vm823, %v711
        %831 = vst.msk [vmem:[%s310 + $0x38] sm:$0xff] %vm823, %v714
        %832 = vst.msk [vmem:[%s310 + $0x40] sm:$0xff] %vm823, %v717
        %833 = vst.msk [vmem:[%s310 + $0x48] sm:$0xff] %vm823, %v720
        %834 = vst.msk [vmem:[%s310 + $0x50] sm:$0xff] %vm823, %v723
        %835 = vst.msk [vmem:[%s310 + $0x58] sm:$0xff] %vm823, %v726
        %836 = vst.msk [vmem:[%s310 + $0x60] sm:$0xff] %vm823, %v729
        %837 = vst.msk [vmem:[%s310 + $0x68] sm:$0xff] %vm823, %v732
        %838 = vst.msk [vmem:[%s310 + $0x70] sm:$0xff] %vm823, %v735
        %839 = vst.msk [vmem:[%s310 + $0x78] sm:$0xff] %vm823, %v738
        %840 = vst.msk [vmem:[%s315] sm:$0xff] %vm823, %v773
        %841 = vst.msk [vmem:[%s315 + $0x8] sm:$0xff] %vm823, %v776
        %842 = vst.msk [vmem:[%s315 + $0x10] sm:$0xff] %vm823, %v779
        %843 = vst.msk [vmem:[%s315 + $0x18] sm:$0xff] %vm823, %v782
        %844 = vst.msk [vmem:[%s315 + $0x20] sm:$0xff] %vm823, %v785
        %845 = vst.msk [vmem:[%s315 + $0x28] sm:$0xff] %vm823, %v788
        %846 = vst.msk [vmem:[%s315 + $0x30] sm:$0xff] %vm823, %v791
        %847 = vst.msk [vmem:[%s315 + $0x38] sm:$0xff] %vm823, %v794
        %848 = vst.msk [vmem:[%s315 + $0x40] sm:$0xff] %vm823, %v797
        %849 = vst.msk [vmem:[%s315 + $0x48] sm:$0xff] %vm823, %v800
        %850 = vst.msk [vmem:[%s315 + $0x50] sm:$0xff] %vm823, %v803
        %851 = vst.msk [vmem:[%s315 + $0x58] sm:$0xff] %vm823, %v806
        %852 = vst.msk [vmem:[%s315 + $0x60] sm:$0xff] %vm823, %v809
        %853 = vst.msk [vmem:[%s315 + $0x68] sm:$0xff] %vm823, %v812
        %854 = vst.msk [vmem:[%s315 + $0x70] sm:$0xff] %vm823, %v815
        %855 = vst.msk [vmem:[%s315 + $0x78] sm:$0xff] %vm823, %v818
      $region40: #{base_dense_layer.2} parent=35 // pred_fallthru
        _
      %p856 = scmp.ne.s32.totalorder %s23, 0
      // Predicated region
      $region41: #{base_dense_layer.2} parent=35 // pred_check
        %p857 = pneg %p856
      $region42: #{base_dense_layer.2} parent=35 // pred_check_branch
        %859 = sbr.rel (%p857) target = $region44
      $region43: #{base_dense_layer.2} parent=35 // pred_region
        %v860 = vld [vmem:[%s310] sm:$0xff]
        %v861 = vld [vmem:[%s310 + $0x8] sm:$0xff]
        %v862 = vld [vmem:[%s310 + $0x10] sm:$0xff]
        %v863 = vld [vmem:[%s310 + $0x18] sm:$0xff]
        %v864 = vld [vmem:[%s310 + $0x20] sm:$0xff]
        %v865 = vld [vmem:[%s310 + $0x28] sm:$0xff]
        %v866 = vld [vmem:[%s310 + $0x30] sm:$0xff]
        %v867 = vld [vmem:[%s310 + $0x38] sm:$0xff]
        %v868 = vld [vmem:[%s310 + $0x40] sm:$0xff]
        %v869 = vld [vmem:[%s310 + $0x48] sm:$0xff]
        %v870 = vld [vmem:[%s310 + $0x50] sm:$0xff]
        %v871 = vld [vmem:[%s310 + $0x58] sm:$0xff]
        %v872 = vld [vmem:[%s310 + $0x60] sm:$0xff]
        %v873 = vld [vmem:[%s310 + $0x68] sm:$0xff]
        %v874 = vld [vmem:[%s310 + $0x70] sm:$0xff]
        %v875 = vld [vmem:[%s310 + $0x78] sm:$0xff]
        %v876 = vadd.f32 %v860, %v693
        %v877 = vadd.f32 %v861, %v696
        %v878 = vadd.f32 %v862, %v699
        %v879 = vadd.f32 %v863, %v702
        %v880 = vadd.f32 %v864, %v705
        %v881 = vadd.f32 %v865, %v708
        %v882 = vadd.f32 %v866, %v711
        %v883 = vadd.f32 %v867, %v714
        %v884 = vadd.f32 %v868, %v717
        %v885 = vadd.f32 %v869, %v720
        %v886 = vadd.f32 %v870, %v723
        %v887 = vadd.f32 %v871, %v726
        %v888 = vadd.f32 %v872, %v729
        %v889 = vadd.f32 %v873, %v732
        %v890 = vadd.f32 %v874, %v735
        %v891 = vadd.f32 %v875, %v738
        %vm892 = vcmask 7168
        %893 = vst.msk [vmem:[%s310] sm:$0xff] %vm892, %v876
        %894 = vst.msk [vmem:[%s310 + $0x8] sm:$0xff] %vm892, %v877
        %895 = vst.msk [vmem:[%s310 + $0x10] sm:$0xff] %vm892, %v878
        %896 = vst.msk [vmem:[%s310 + $0x18] sm:$0xff] %vm892, %v879
        %897 = vst.msk [vmem:[%s310 + $0x20] sm:$0xff] %vm892, %v880
        %898 = vst.msk [vmem:[%s310 + $0x28] sm:$0xff] %vm892, %v881
        %899 = vst.msk [vmem:[%s310 + $0x30] sm:$0xff] %vm892, %v882
        %900 = vst.msk [vmem:[%s310 + $0x38] sm:$0xff] %vm892, %v883
        %901 = vst.msk [vmem:[%s310 + $0x40] sm:$0xff] %vm892, %v884
        %902 = vst.msk [vmem:[%s310 + $0x48] sm:$0xff] %vm892, %v885
        %903 = vst.msk [vmem:[%s310 + $0x50] sm:$0xff] %vm892, %v886
        %904 = vst.msk [vmem:[%s310 + $0x58] sm:$0xff] %vm892, %v887
        %905 = vst.msk [vmem:[%s310 + $0x60] sm:$0xff] %vm892, %v888
        %906 = vst.msk [vmem:[%s310 + $0x68] sm:$0xff] %vm892, %v889
        %907 = vst.msk [vmem:[%s310 + $0x70] sm:$0xff] %vm892, %v890
        %908 = vst.msk [vmem:[%s310 + $0x78] sm:$0xff] %vm892, %v891
        %v909 = vld [vmem:[%s315] sm:$0xff]
        %v910 = vld [vmem:[%s315 + $0x8] sm:$0xff]
        %v911 = vld [vmem:[%s315 + $0x10] sm:$0xff]
        %v912 = vld [vmem:[%s315 + $0x18] sm:$0xff]
        %v913 = vld [vmem:[%s315 + $0x20] sm:$0xff]
        %v914 = vld [vmem:[%s315 + $0x28] sm:$0xff]
        %v915 = vld [vmem:[%s315 + $0x30] sm:$0xff]
        %v916 = vld [vmem:[%s315 + $0x38] sm:$0xff]
        %v917 = vld [vmem:[%s315 + $0x40] sm:$0xff]
        %v918 = vld [vmem:[%s315 + $0x48] sm:$0xff]
        %v919 = vld [vmem:[%s315 + $0x50] sm:$0xff]
        %v920 = vld [vmem:[%s315 + $0x58] sm:$0xff]
        %v921 = vld [vmem:[%s315 + $0x60] sm:$0xff]
        %v922 = vld [vmem:[%s315 + $0x68] sm:$0xff]
        %v923 = vld [vmem:[%s315 + $0x70] sm:$0xff]
        %v924 = vld [vmem:[%s315 + $0x78] sm:$0xff]
        %v925 = vadd.f32 %v909, %v773
        %v926 = vadd.f32 %v910, %v776
        %v927 = vadd.f32 %v911, %v779
        %v928 = vadd.f32 %v912, %v782
        %v929 = vadd.f32 %v913, %v785
        %v930 = vadd.f32 %v914, %v788
        %v931 = vadd.f32 %v915, %v791
        %v932 = vadd.f32 %v916, %v794
        %v933 = vadd.f32 %v917, %v797
        %v934 = vadd.f32 %v918, %v800
        %v935 = vadd.f32 %v919, %v803
        %v936 = vadd.f32 %v920, %v806
        %v937 = vadd.f32 %v921, %v809
        %v938 = vadd.f32 %v922, %v812
        %v939 = vadd.f32 %v923, %v815
        %v940 = vadd.f32 %v924, %v818
        %941 = vst.msk [vmem:[%s315] sm:$0xff] %vm892, %v925
        %942 = vst.msk [vmem:[%s315 + $0x8] sm:$0xff] %vm892, %v926
        %943 = vst.msk [vmem:[%s315 + $0x10] sm:$0xff] %vm892, %v927
        %944 = vst.msk [vmem:[%s315 + $0x18] sm:$0xff] %vm892, %v928
        %945 = vst.msk [vmem:[%s315 + $0x20] sm:$0xff] %vm892, %v929
        %946 = vst.msk [vmem:[%s315 + $0x28] sm:$0xff] %vm892, %v930
        %947 = vst.msk [vmem:[%s315 + $0x30] sm:$0xff] %vm892, %v931
        %948 = vst.msk [vmem:[%s315 + $0x38] sm:$0xff] %vm892, %v932
        %949 = vst.msk [vmem:[%s315 + $0x40] sm:$0xff] %vm892, %v933
        %950 = vst.msk [vmem:[%s315 + $0x48] sm:$0xff] %vm892, %v934
        %951 = vst.msk [vmem:[%s315 + $0x50] sm:$0xff] %vm892, %v935
        %952 = vst.msk [vmem:[%s315 + $0x58] sm:$0xff] %vm892, %v936
        %953 = vst.msk [vmem:[%s315 + $0x60] sm:$0xff] %vm892, %v937
        %954 = vst.msk [vmem:[%s315 + $0x68] sm:$0xff] %vm892, %v938
        %955 = vst.msk [vmem:[%s315 + $0x70] sm:$0xff] %vm892, %v939
        %956 = vst.msk [vmem:[%s315 + $0x78] sm:$0xff] %vm892, %v940
      $region44: #{base_dense_layer.2} parent=35 // pred_fallthru
        _
      %s957 = smul.u32 2, %s23
      %p958 = scmp.lt.s32.totalorder %s22, 1
      %s959 = scalar_select %p958, %s22, 1
      %p960 = scmp.lt.s32.totalorder %s957, 1
      %s961 = scalar_select %p960, %s957, 1
      %s962 = smul.addr %s959, 32
      %s963 = sadd.s32 %s961, %s962
      %s964 = smul.addr %s963, 4
      %s965 = scalar_lea.vmem %s4, %s964
      %p966 = scmp.lt.s32.totalorder %s22, 1
      %s967 = scalar_select %p966, %s22, 1
      %s968 = smul.addr %s967, 16
      %s969 = smul.addr %s968, 8
      %s970 = scalar_lea.vmem %s5, %s969
      %p971 = scmp.lt.s32.totalorder %s22, 1
      %s972 = scalar_select %p971, %s22, 1
      %s973 = smul.addr %s972, 16
      %s974 = smul.addr %s973, 8
      %s975 = scalar_lea.vmem %s6, %s974
      // Predicated region
      $region45: #{base_dense_layer.2} parent=35 // pred_check
        %p976 = pneg %p141
      $region46: #{base_dense_layer.2} parent=35 // pred_check_branch
        %978 = sbr.rel (%p976) target = $region48
      $region47: #{base_dense_layer.2} parent=35 // pred_region
        %s979 = smul.u32 2, %s23
      $region48: #{base_dense_layer.2} parent=35 // pred_fallthru
        _
      // Predicated region
      $region49: #{base_dense_layer.2} parent=35 // pred_check
        %p980 = pneg %p167
      $region50: #{base_dense_layer.2} parent=35 // pred_check_branch
        %982 = sbr.rel (%p980) target = $region52
      $region51: #{base_dense_layer.2} parent=35 // pred_region
        _
      $region52: #{base_dense_layer.2} parent=35 // pred_fallthru
        _
      // Predicated region
      $region53: #{base_dense_layer.2} parent=35 // pred_check
        %p983 = pneg %p193
      $region54: #{base_dense_layer.2} parent=35 // pred_check_branch
        %985 = sbr.rel (%p983) target = $region56
      $region55: #{base_dense_layer.2} parent=35 // pred_region
        _
      $region56: #{base_dense_layer.2} parent=35 // pred_fallthru
        _
    $region36: #{base_dense_layer.2} parent=5 // pred_fallthru
      _
    %p986 = scmp.le.s32.totalorder 2, %s13
    // Predicated region
    $region57: #{base_dense_layer.2} parent=5 // pred_check
      %p987 = pneg %p986
    $region58: #{base_dense_layer.2} parent=5 // pred_check_branch
      %989 = sbr.rel (%p987) target = $region60
    $region59: #{base_dense_layer.2} parent=5 // pred_region
      %s990 = ssub.s32 %s13, 2
      // Predicated region
      $region61: #{base_dense_layer.2} parent=59 // pred_check
        %p991 = pneg %p147
      $region62: #{base_dense_layer.2} parent=59 // pred_check_branch
        %993 = sbr.rel (%p991) target = $region64
      $region63: #{base_dense_layer.2} parent=59 // pred_region
        %s994 = smul.u32 2, %s25
        %p995 = scmp.lt.s32.totalorder %s24, 1
        %s996 = scalar_select %p995, %s24, 1
        %p997 = scmp.lt.s32.totalorder %s994, 1
        %s998 = scalar_select %p997, %s994, 1
        %s999 = smul.addr %s996, 32
        %s1000 = sadd.s32 %s998, %s999
        %s1001 = smul.addr %s1000, 4
        %s1002 = scalar_lea.vmem %s4, %s1001
      $region64: #{base_dense_layer.2} parent=59 // pred_fallthru
        _
      // Predicated region
      $region65: #{base_dense_layer.2} parent=59 // pred_check
        %p1003 = pneg %p173
      $region66: #{base_dense_layer.2} parent=59 // pred_check_branch
        %1005 = sbr.rel (%p1003) target = $region68
      $region67: #{base_dense_layer.2} parent=59 // pred_region
        %p1006 = scmp.lt.s32.totalorder %s24, 1
        %s1007 = scalar_select %p1006, %s24, 1
        %s1008 = smul.addr %s1007, 16
        %s1009 = smul.addr %s1008, 8
        %s1010 = scalar_lea.vmem %s5, %s1009
      $region68: #{base_dense_layer.2} parent=59 // pred_fallthru
        _
      // Predicated region
      $region69: #{base_dense_layer.2} parent=59 // pred_check
        %p1011 = pneg %p199
      $region70: #{base_dense_layer.2} parent=59 // pred_check_branch
        %1013 = sbr.rel (%p1011) target = $region72
      $region71: #{base_dense_layer.2} parent=59 // pred_region
        %p1014 = scmp.lt.s32.totalorder %s24, 1
        %s1015 = scalar_select %p1014, %s24, 1
        %s1016 = smul.addr %s1015, 16
        %s1017 = smul.addr %s1016, 8
        %s1018 = scalar_lea.vmem %s6, %s1017
      $region72: #{base_dense_layer.2} parent=59 // pred_fallthru
        _
    $region60: #{base_dense_layer.2} parent=5 // pred_fallthru
      _
  $region6: #{base_dense_layer.2} parent=0 // loop_footer
    %s17 = sadd.s32 1, %s13
  $region7: #{base_dense_layer.2} parent=0 // loop_footer_branch
    %12 = sbr.rel target = $region3
  $region8: #{base_dense_layer.2} parent=0 // loop_exit
    _

// kernel: base_dense_layer.3
$region0: #{base_dense_layer.3}
  #allocation0 [shape = 'u32[]', space=smem, size = 0x4, offset = 0x4, fixed_abs, tag = 'smem constant byte address 0x4 - core index']
  #allocation1 [shape = 'u32[144,128]{1,0:T(1,128)}', space=vmem, size = 0x12000, scoped, tag = 'internal scratch']
  %s0 = inlined_call_operand.vmem [shape: bf16[2,128,256], index: 0, kind: input, shape index: {}]
  %s1 = inlined_call_operand.vmem [shape: f32[128,1], index: 1, kind: input, shape index: {}]
  %s2 = inlined_call_operand.vmem [shape: f32[128,1], index: 2, kind: input, shape index: {}]
  %s3 = inlined_call_operand.vmem [shape: bf16[3,96,128], index: 3, kind: input, shape index: {}]
  %s4 = inlined_call_operand.vmem [shape: f32[9,1,256], index: 4, kind: input, shape index: {}]
  %s5 = inlined_call_operand.vmem [shape: f32[2,32,256], index: 5, kind: output, shape index: {}]
  %s6 = sld [smem:[#allocation0]]
  $region53: #{base_dense_layer.3} parent=0
    _
  %s8 = ssub.s32 1, %s6
  %s9 = scalar_select 0, %s8, %s6
  loop: start=0, step=1, limit=4
  $region2: #{base_dense_layer.3} parent=0 // loop_pre_header
    _
  $region3: #{base_dense_layer.3} parent=0 // loop_header
    %s11 = sphi 0, %s15
    %p12 = scmp.ge.s32.totalorder %s11, 4
    %s21 = sphi 0, %s23
    %s24 = sphi 0, %s21
    %s25 = sphi 0, %s24
    %s41 = sphi 0, %s25
    %s45 = sphi 0, %s45
    %s47 = sphi 0, %s45
    %s48 = sphi 0, %s47
    %s62 = sphi 0, %s48
    %s66 = sphi 0, %s66
    %s68 = sphi 0, %s66
    %s69 = sphi 0, %s68
    %s83 = sphi 0, %s69
    %s87 = sphi 0, %s87
    %s89 = sphi 0, %s87
    %s90 = sphi 0, %s89
    %s104 = sphi 0, %s90
    %s108 = sphi 0, %s108
    %s110 = sphi 0, %s108
    %s111 = sphi 0, %s110
    %s125 = sphi 0, %s111
    %s131 = sphi 0, %s133
    %s134 = sphi 0, %s131
    %s135 = sphi 0, %s134
    %s151 = sphi 0, %s135
  $region4: #{base_dense_layer.3} parent=0 // loop_header_branch
    %14 = sbr.rel (%p12) target = $region8
  $region5: #{base_dense_layer.3} parent=0 // loop_body
    %s16 = ssub.s32 %s11, 1
    %s17 = ssub.s32 %s11, 2
    %s18 = sadd.s32 %s11, 1
    %s19 = ssub.s32 %s11, %s18
    %p20 = scmp.eq.s32.totalorder %s19, 0
    %s22 = sadd.s32 %s21, 1
    %s23 = scalar_select %p20, %s21, %s22
    %p26 = pneg %p20
    %p27 = scmp.eq.s32.totalorder %s11, 1
    %p28 = por %p26, %p27
    %p29 = scmp.ne.s32.totalorder %s21, %s24
    %p30 = scmp.eq.s32.totalorder %s11, 0
    %p31 = por %p29, %p30
    %p32 = scmp.ne.s32.totalorder %s21, %s24
    %p33 = scmp.eq.s32.totalorder %s16, 1
    %p34 = por %p32, %p33
    %p35 = scmp.ne.s32.totalorder %s24, %s25
    %p36 = scmp.eq.s32.totalorder %s16, 0
    %p37 = por %p35, %p36
    %p38 = scmp.ne.s32.totalorder %s24, %s25
    %p39 = scmp.eq.s32.totalorder %s17, 1
    %p40 = por %p38, %p39
    %p42 = scmp.ne.s32.totalorder %s25, %s41
    %p43 = scmp.eq.s32.totalorder %s17, 0
    %p44 = por %p42, %p43
    %s46 = sadd.s32 %s45, 1
    %p49 = scmp.eq.s32.totalorder %s11, 1
    %p50 = scmp.ne.s32.totalorder %s45, %s47
    %p51 = scmp.eq.s32.totalorder %s11, 0
    %p52 = por %p50, %p51
    %p53 = scmp.ne.s32.totalorder %s45, %s47
    %p54 = scmp.eq.s32.totalorder %s16, 1
    %p55 = por %p53, %p54
    %p56 = scmp.ne.s32.totalorder %s47, %s48
    %p57 = scmp.eq.s32.totalorder %s16, 0
    %p58 = por %p56, %p57
    %p59 = scmp.ne.s32.totalorder %s47, %s48
    %p60 = scmp.eq.s32.totalorder %s17, 1
    %p61 = por %p59, %p60
    %p63 = scmp.ne.s32.totalorder %s48, %s62
    %p64 = scmp.eq.s32.totalorder %s17, 0
    %p65 = por %p63, %p64
    %s67 = sadd.s32 %s66, 1
    %p70 = scmp.eq.s32.totalorder %s11, 1
    %p71 = scmp.ne.s32.totalorder %s66, %s68
    %p72 = scmp.eq.s32.totalorder %s11, 0
    %p73 = por %p71, %p72
    %p74 = scmp.ne.s32.totalorder %s66, %s68
    %p75 = scmp.eq.s32.totalorder %s16, 1
    %p76 = por %p74, %p75
    %p77 = scmp.ne.s32.totalorder %s68, %s69
    %p78 = scmp.eq.s32.totalorder %s16, 0
    %p79 = por %p77, %p78
    %p80 = scmp.ne.s32.totalorder %s68, %s69
    %p81 = scmp.eq.s32.totalorder %s17, 1
    %p82 = por %p80, %p81
    %p84 = scmp.ne.s32.totalorder %s69, %s83
    %p85 = scmp.eq.s32.totalorder %s17, 0
    %p86 = por %p84, %p85
    %s88 = sadd.s32 %s87, 1
    %p91 = scmp.eq.s32.totalorder %s11, 1
    %p92 = scmp.ne.s32.totalorder %s87, %s89
    %p93 = scmp.eq.s32.totalorder %s11, 0
    %p94 = por %p92, %p93
    %p95 = scmp.ne.s32.totalorder %s87, %s89
    %p96 = scmp.eq.s32.totalorder %s16, 1
    %p97 = por %p95, %p96
    %p98 = scmp.ne.s32.totalorder %s89, %s90
    %p99 = scmp.eq.s32.totalorder %s16, 0
    %p100 = por %p98, %p99
    %p101 = scmp.ne.s32.totalorder %s89, %s90
    %p102 = scmp.eq.s32.totalorder %s17, 1
    %p103 = por %p101, %p102
    %p105 = scmp.ne.s32.totalorder %s90, %s104
    %p106 = scmp.eq.s32.totalorder %s17, 0
    %p107 = por %p105, %p106
    %s109 = sadd.s32 %s108, 1
    %p112 = scmp.eq.s32.totalorder %s11, 1
    %p113 = scmp.ne.s32.totalorder %s108, %s110
    %p114 = scmp.eq.s32.totalorder %s11, 0
    %p115 = por %p113, %p114
    %p116 = scmp.ne.s32.totalorder %s108, %s110
    %p117 = scmp.eq.s32.totalorder %s16, 1
    %p118 = por %p116, %p117
    %p119 = scmp.ne.s32.totalorder %s110, %s111
    %p120 = scmp.eq.s32.totalorder %s16, 0
    %p121 = por %p119, %p120
    %p122 = scmp.ne.s32.totalorder %s110, %s111
    %p123 = scmp.eq.s32.totalorder %s17, 1
    %p124 = por %p122, %p123
    %p126 = scmp.ne.s32.totalorder %s111, %s125
    %p127 = scmp.eq.s32.totalorder %s17, 0
    %p128 = por %p126, %p127
    %s129 = ssub.s32 %s11, %s18
    %p130 = scmp.eq.s32.totalorder %s129, 0
    %s132 = sadd.s32 %s131, 1
    %s133 = scalar_select %p130, %s131, %s132
    %p136 = pneg %p130
    %p137 = scmp.eq.s32.totalorder %s11, 1
    %p138 = por %p136, %p137
    %p139 = scmp.ne.s32.totalorder %s131, %s134
    %p140 = scmp.eq.s32.totalorder %s11, 0
    %p141 = por %p139, %p140
    %p142 = scmp.ne.s32.totalorder %s131, %s134
    %p143 = scmp.eq.s32.totalorder %s16, 1
    %p144 = por %p142, %p143
    %p145 = scmp.ne.s32.totalorder %s134, %s135
    %p146 = scmp.eq.s32.totalorder %s16, 0
    %p147 = por %p145, %p146
    %p148 = scmp.ne.s32.totalorder %s134, %s135
    %p149 = scmp.eq.s32.totalorder %s17, 1
    %p150 = por %p148, %p149
    %p152 = scmp.ne.s32.totalorder %s135, %s151
    %p153 = scmp.eq.s32.totalorder %s17, 0
    %p154 = por %p152, %p153
    %p155 = scmp.le.s32.totalorder 1, %s11
    %p156 = scmp.lt.s32.totalorder %s11, 3
    %p157 = pnand %p155, %p156
    %p158 = pneg %p157
    // Predicated region
    $region9: #{base_dense_layer.3} parent=5 // pred_check
      _
    $region10: #{base_dense_layer.3} parent=5 // pred_check_branch
      %160 = sbr.rel (%p157) target = $region12
    $region11: #{base_dense_layer.3} parent=5 // pred_region
      %s161 = ssub.s32 %s11, 1
      // Predicated region
      $region13: #{base_dense_layer.3} parent=11 // pred_check
        %p162 = pneg %p58
      $region14: #{base_dense_layer.3} parent=11 // pred_check_branch
        %164 = sbr.rel (%p162) target = $region16
      $region15: #{base_dense_layer.3} parent=11 // pred_region
        _
      $region16: #{base_dense_layer.3} parent=11 // pred_fallthru
        _
      // Predicated region
      $region17: #{base_dense_layer.3} parent=11 // pred_check
        %p165 = pneg %p79
      $region18: #{base_dense_layer.3} parent=11 // pred_check_branch
        %167 = sbr.rel (%p165) target = $region20
      $region19: #{base_dense_layer.3} parent=11 // pred_region
        _
      $region20: #{base_dense_layer.3} parent=11 // pred_fallthru
        _
      // Predicated region
      $region21: #{base_dense_layer.3} parent=11 // pred_check
        %p168 = pneg %p100
      $region22: #{base_dense_layer.3} parent=11 // pred_check_branch
        %170 = sbr.rel (%p168) target = $region24
      $region23: #{base_dense_layer.3} parent=11 // pred_region
        _
      $region24: #{base_dense_layer.3} parent=11 // pred_fallthru
        _
      // Predicated region
      $region25: #{base_dense_layer.3} parent=11 // pred_check
        %p171 = pneg %p121
      $region26: #{base_dense_layer.3} parent=11 // pred_check_branch
        %173 = sbr.rel (%p171) target = $region28
      $region27: #{base_dense_layer.3} parent=11 // pred_region
        _
      $region28: #{base_dense_layer.3} parent=11 // pred_fallthru
        _
    $region12: #{base_dense_layer.3} parent=5 // pred_fallthru
      _
    %p174 = scmp.lt.s32.totalorder %s11, 2
    // Predicated region
    $region29: #{base_dense_layer.3} parent=5 // pred_check
      %p175 = pneg %p174
    $region30: #{base_dense_layer.3} parent=5 // pred_check_branch
      %177 = sbr.rel (%p175) target = $region32
    $region31: #{base_dense_layer.3} parent=5 // pred_region
      // Predicated region
      $region33: #{base_dense_layer.3} parent=31 // pred_check
        %p178 = pneg %p31
      $region34: #{base_dense_layer.3} parent=31 // pred_check_branch
        %180 = sbr.rel (%p178) target = $region36
      $region35: #{base_dense_layer.3} parent=31 // pred_region
        %p181 = scmp.lt.s32.totalorder %s11, 1
        %s182 = scalar_select %p181, %s11, 1
        %s183 = smul.addr %s182, 32
        %s184 = smul.addr %s183, 4
        %s185 = scalar_lea.vmem %s0, %s184
      $region36: #{base_dense_layer.3} parent=31 // pred_fallthru
        _
    $region32: #{base_dense_layer.3} parent=5 // pred_fallthru
      _
    %p186 = scmp.le.s32.totalorder 1, %s11
    %p187 = scmp.lt.s32.totalorder %s11, 3
    %p188 = pnand %p186, %p187
    %p189 = pneg %p188
    // Predicated region
    $region37: #{base_dense_layer.3} parent=5 // pred_check
      _
    $region38: #{base_dense_layer.3} parent=5 // pred_check_branch
      %191 = sbr.rel (%p188) target = $region40
    $region39: #{base_dense_layer.3} parent=5 // pred_region
      %s192 = ssub.s32 %s11, 1
      %p193 = scmp.lt.s32.totalorder %s16, 1
      %s194 = scalar_select %p193, %s16, 1
      %s195 = smul.addr %s194, 32
      %s196 = smul.addr %s195, 4
      %s197 = scalar_lea.vmem %s0, %s196
      %p198 = pneg %p37
      %p199 = pneg %p34
      %p200 = pneg %p58
      %p201 = pneg %p55
      %p202 = pneg %p79
      %p203 = pneg %p76
      %p204 = pneg %p100
      %p205 = pneg %p97
      %p206 = pneg %p121
      %p207 = pneg %p118
      %p208 = pneg %p147
      %p209 = pneg %p144
      %p210 = scmp.lt.s32.totalorder %s16, 1
      %s211 = scalar_select %p210, %s16, 1
      %s212 = smul.addr %s211, 8
      %s213 = smul.addr %s212, 8
      %s214 = scalar_lea.vmem %s5, %s213
      %p215 = scmp.lt.s32.totalorder %s16, 1
      %s216 = scalar_select %p215, %s16, 1
      %s217 = smul.addr %s216, 32
      %s218 = smul.addr %s217, 4
      %s219 = scalar_lea.vmem %s0, %s218
      %p220 = scmp.lt.s32.totalorder %s16, 1
      %s221 = scalar_select %p220, %s16, 1
      %s222 = smul.addr %s221, 8
      %s223 = smul.addr %s222, 8
      %s224 = scalar_lea.vmem %s5, %s223
      %v226 = vld [vmem:[%s219] sm:$0xff]
      %v227 = vld [vmem:[%s219 + $0x8] sm:$0xff]
      %v228 = vld [vmem:[%s219 + $0x10] sm:$0xff]
      %v229 = vld [vmem:[%s219 + $0x18] sm:$0xff]
      %v230 = vld [vmem:[%s219 + $0x20] sm:$0xff]
      %v231 = vld [vmem:[%s219 + $0x28] sm:$0xff]
      %v232 = vld [vmem:[%s219 + $0x30] sm:$0xff]
      %v233 = vld [vmem:[%s219 + $0x38] sm:$0xff]
      %v234 = vld [vmem:[%s219 + $0x40] sm:$0xff]
      %v235 = vld [vmem:[%s219 + $0x48] sm:$0xff]
      %v236 = vld [vmem:[%s219 + $0x50] sm:$0xff]
      %v237 = vld [vmem:[%s219 + $0x58] sm:$0xff]
      %v238 = vld [vmem:[%s219 + $0x60] sm:$0xff]
      %v239 = vld [vmem:[%s219 + $0x68] sm:$0xff]
      %v240 = vld [vmem:[%s219 + $0x70] sm:$0xff]
      %v241 = vld [vmem:[%s219 + $0x78] sm:$0xff]
      %v242 = vunpack.c.l.bf16 %v226
      %v243 = vunpack.c.h.bf16 %v226
      %v244 = vunpack.c.l.bf16 %v227
      %v245 = vunpack.c.h.bf16 %v227
      %v246 = vunpack.c.l.bf16 %v228
      %v247 = vunpack.c.h.bf16 %v228
      %v248 = vunpack.c.l.bf16 %v229
      %v249 = vunpack.c.h.bf16 %v229
      %v250 = vunpack.c.l.bf16 %v230
      %v251 = vunpack.c.h.bf16 %v230
      %v252 = vunpack.c.l.bf16 %v231
      %v253 = vunpack.c.h.bf16 %v231
      %v254 = vunpack.c.l.bf16 %v232
      %v255 = vunpack.c.h.bf16 %v232
      %v256 = vunpack.c.l.bf16 %v233
      %v257 = vunpack.c.h.bf16 %v233
      %v258 = vunpack.c.l.bf16 %v234
      %v259 = vunpack.c.h.bf16 %v234
      %v260 = vunpack.c.l.bf16 %v235
      %v261 = vunpack.c.h.bf16 %v235
      %v262 = vunpack.c.l.bf16 %v236
      %v263 = vunpack.c.h.bf16 %v236
      %v264 = vunpack.c.l.bf16 %v237
      %v265 = vunpack.c.h.bf16 %v237
      %v266 = vunpack.c.l.bf16 %v238
      %v267 = vunpack.c.h.bf16 %v238
      %v268 = vunpack.c.l.bf16 %v239
      %v269 = vunpack.c.h.bf16 %v239
      %v270 = vunpack.c.l.bf16 %v240
      %v271 = vunpack.c.h.bf16 %v240
      %v272 = vunpack.c.l.bf16 %v241
      %v273 = vunpack.c.h.bf16 %v241
      %v274 = vld [vmem:[%s1] sm:$0xff]
      %v275 = vld [vmem:[%s1 + $0x8] sm:$0xff]
      %v276 = vld [vmem:[%s1 + $0x10] sm:$0xff]
      %v277 = vld [vmem:[%s1 + $0x18] sm:$0xff]
      %v278 = vld [vmem:[%s1 + $0x20] sm:$0xff]
      %v279 = vld [vmem:[%s1 + $0x28] sm:$0xff]
      %v280 = vld [vmem:[%s1 + $0x30] sm:$0xff]
      %v281 = vld [vmem:[%s1 + $0x38] sm:$0xff]
      %v282 = vld [vmem:[%s1 + $0x40] sm:$0xff]
      %v283 = vld [vmem:[%s1 + $0x48] sm:$0xff]
      %v284 = vld [vmem:[%s1 + $0x50] sm:$0xff]
      %v285 = vld [vmem:[%s1 + $0x58] sm:$0xff]
      %v286 = vld [vmem:[%s1 + $0x60] sm:$0xff]
      %v287 = vld [vmem:[%s1 + $0x68] sm:$0xff]
      %v288 = vld [vmem:[%s1 + $0x70] sm:$0xff]
      %v289 = vld [vmem:[%s1 + $0x78] sm:$0xff]
      %291 = vset.pattern.permute.xlu0 0
      %292 = vperm.xlu0 %291, %v274
      %v293 = vpop.permute.xlu0 %292
      %296 = vset.pattern.permute.xlu0 0
      %297 = vperm.xlu0 %296, %v275
      %v298 = vpop.permute.xlu0 %297
      %301 = vset.pattern.permute.xlu0 0
      %302 = vperm.xlu0 %301, %v276
      %v303 = vpop.permute.xlu0 %302
      %306 = vset.pattern.permute.xlu0 0
      %307 = vperm.xlu0 %306, %v277
      %v308 = vpop.permute.xlu0 %307
      %311 = vset.pattern.permute.xlu0 0
      %312 = vperm.xlu0 %311, %v278
      %v313 = vpop.permute.xlu0 %312
      %316 = vset.pattern.permute.xlu0 0
      %317 = vperm.xlu0 %316, %v279
      %v318 = vpop.permute.xlu0 %317
      %321 = vset.pattern.permute.xlu0 0
      %322 = vperm.xlu0 %321, %v280
      %v323 = vpop.permute.xlu0 %322
      %326 = vset.pattern.permute.xlu0 0
      %327 = vperm.xlu0 %326, %v281
      %v328 = vpop.permute.xlu0 %327
      %331 = vset.pattern.permute.xlu0 0
      %332 = vperm.xlu0 %331, %v282
      %v333 = vpop.permute.xlu0 %332
      %336 = vset.pattern.permute.xlu0 0
      %337 = vperm.xlu0 %336, %v283
      %v338 = vpop.permute.xlu0 %337
      %341 = vset.pattern.permute.xlu0 0
      %342 = vperm.xlu0 %341, %v284
      %v343 = vpop.permute.xlu0 %342
      %346 = vset.pattern.permute.xlu0 0
      %347 = vperm.xlu0 %346, %v285
      %v348 = vpop.permute.xlu0 %347
      %351 = vset.pattern.permute.xlu0 0
      %352 = vperm.xlu0 %351, %v286
      %v353 = vpop.permute.xlu0 %352
      %356 = vset.pattern.permute.xlu0 0
      %357 = vperm.xlu0 %356, %v287
      %v358 = vpop.permute.xlu0 %357
      %361 = vset.pattern.permute.xlu0 0
      %362 = vperm.xlu0 %361, %v288
      %v363 = vpop.permute.xlu0 %362
      %366 = vset.pattern.permute.xlu0 0
      %367 = vperm.xlu0 %366, %v289
      %v368 = vpop.permute.xlu0 %367
      %v370 = vmul.f32 %v242, %v293
      %v371 = vmul.f32 %v243, %v293
      %v372 = vmul.f32 %v244, %v298
      %v373 = vmul.f32 %v245, %v298
      %v374 = vmul.f32 %v246, %v303
      %v375 = vmul.f32 %v247, %v303
      %v376 = vmul.f32 %v248, %v308
      %v377 = vmul.f32 %v249, %v308
      %v378 = vmul.f32 %v250, %v313
      %v379 = vmul.f32 %v251, %v313
      %v380 = vmul.f32 %v252, %v318
      %v381 = vmul.f32 %v253, %v318
      %v382 = vmul.f32 %v254, %v323
      %v383 = vmul.f32 %v255, %v323
      %v384 = vmul.f32 %v256, %v328
      %v385 = vmul.f32 %v257, %v328
      %v386 = vmul.f32 %v258, %v333
      %v387 = vmul.f32 %v259, %v333
      %v388 = vmul.f32 %v260, %v338
      %v389 = vmul.f32 %v261, %v338
      %v390 = vmul.f32 %v262, %v343
      %v391 = vmul.f32 %v263, %v343
      %v392 = vmul.f32 %v264, %v348
      %v393 = vmul.f32 %v265, %v348
      %v394 = vmul.f32 %v266, %v353
      %v395 = vmul.f32 %v267, %v353
      %v396 = vmul.f32 %v268, %v358
      %v397 = vmul.f32 %v269, %v358
      %v398 = vmul.f32 %v270, %v363
      %v399 = vmul.f32 %v271, %v363
      %v400 = vmul.f32 %v272, %v368
      %v401 = vmul.f32 %v273, %v368
      %v402 = vld [vmem:[%s2] sm:$0xff]
      %v403 = vld [vmem:[%s2 + $0x8] sm:$0xff]
      %v404 = vld [vmem:[%s2 + $0x10] sm:$0xff]
      %v405 = vld [vmem:[%s2 + $0x18] sm:$0xff]
      %v406 = vld [vmem:[%s2 + $0x20] sm:$0xff]
      %v407 = vld [vmem:[%s2 + $0x28] sm:$0xff]
      %v408 = vld [vmem:[%s2 + $0x30] sm:$0xff]
      %v409 = vld [vmem:[%s2 + $0x38] sm:$0xff]
      %v410 = vld [vmem:[%s2 + $0x40] sm:$0xff]
      %v411 = vld [vmem:[%s2 + $0x48] sm:$0xff]
      %v412 = vld [vmem:[%s2 + $0x50] sm:$0xff]
      %v413 = vld [vmem:[%s2 + $0x58] sm:$0xff]
      %v414 = vld [vmem:[%s2 + $0x60] sm:$0xff]
      %v415 = vld [vmem:[%s2 + $0x68] sm:$0xff]
      %v416 = vld [vmem:[%s2 + $0x70] sm:$0xff]
      %v417 = vld [vmem:[%s2 + $0x78] sm:$0xff]
      %419 = vset.pattern.permute.xlu0 0
      %420 = vperm.xlu0 %419, %v402
      %v421 = vpop.permute.xlu0 %420
      %424 = vset.pattern.permute.xlu0 0
      %425 = vperm.xlu0 %424, %v403
      %v426 = vpop.permute.xlu0 %425
      %429 = vset.pattern.permute.xlu0 0
      %430 = vperm.xlu0 %429, %v404
      %v431 = vpop.permute.xlu0 %430
      %434 = vset.pattern.permute.xlu0 0
      %435 = vperm.xlu0 %434, %v405
      %v436 = vpop.permute.xlu0 %435
      %439 = vset.pattern.permute.xlu0 0
      %440 = vperm.xlu0 %439, %v406
      %v441 = vpop.permute.xlu0 %440
      %444 = vset.pattern.permute.xlu0 0
      %445 = vperm.xlu0 %444, %v407
      %v446 = vpop.permute.xlu0 %445
      %449 = vset.pattern.permute.xlu0 0
      %450 = vperm.xlu0 %449, %v408
      %v451 = vpop.permute.xlu0 %450
      %454 = vset.pattern.permute.xlu0 0
      %455 = vperm.xlu0 %454, %v409
      %v456 = vpop.permute.xlu0 %455
      %459 = vset.pattern.permute.xlu0 0
      %460 = vperm.xlu0 %459, %v410
      %v461 = vpop.permute.xlu0 %460
      %464 = vset.pattern.permute.xlu0 0
      %465 = vperm.xlu0 %464, %v411
      %v466 = vpop.permute.xlu0 %465
      %469 = vset.pattern.permute.xlu0 0
      %470 = vperm.xlu0 %469, %v412
      %v471 = vpop.permute.xlu0 %470
      %474 = vset.pattern.permute.xlu0 0
      %475 = vperm.xlu0 %474, %v413
      %v476 = vpop.permute.xlu0 %475
      %479 = vset.pattern.permute.xlu0 0
      %480 = vperm.xlu0 %479, %v414
      %v481 = vpop.permute.xlu0 %480
      %484 = vset.pattern.permute.xlu0 0
      %485 = vperm.xlu0 %484, %v415
      %v486 = vpop.permute.xlu0 %485
      %489 = vset.pattern.permute.xlu0 0
      %490 = vperm.xlu0 %489, %v416
      %v491 = vpop.permute.xlu0 %490
      %494 = vset.pattern.permute.xlu0 0
      %495 = vperm.xlu0 %494, %v417
      %v496 = vpop.permute.xlu0 %495
      %v498 = vadd.f32 %v370, %v421
      %v499 = vadd.f32 %v371, %v421
      %v500 = vadd.f32 %v372, %v426
      %v501 = vadd.f32 %v373, %v426
      %v502 = vadd.f32 %v374, %v431
      %v503 = vadd.f32 %v375, %v431
      %v504 = vadd.f32 %v376, %v436
      %v505 = vadd.f32 %v377, %v436
      %v506 = vadd.f32 %v378, %v441
      %v507 = vadd.f32 %v379, %v441
      %v508 = vadd.f32 %v380, %v446
      %v509 = vadd.f32 %v381, %v446
      %v510 = vadd.f32 %v382, %v451
      %v511 = vadd.f32 %v383, %v451
      %v512 = vadd.f32 %v384, %v456
      %v513 = vadd.f32 %v385, %v456
      %v514 = vadd.f32 %v386, %v461
      %v515 = vadd.f32 %v387, %v461
      %v516 = vadd.f32 %v388, %v466
      %v517 = vadd.f32 %v389, %v466
      %v518 = vadd.f32 %v390, %v471
      %v519 = vadd.f32 %v391, %v471
      %v520 = vadd.f32 %v392, %v476
      %v521 = vadd.f32 %v393, %v476
      %v522 = vadd.f32 %v394, %v481
      %v523 = vadd.f32 %v395, %v481
      %v524 = vadd.f32 %v396, %v486
      %v525 = vadd.f32 %v397, %v486
      %v526 = vadd.f32 %v398, %v491
      %v527 = vadd.f32 %v399, %v491
      %v528 = vadd.f32 %v400, %v496
      %v529 = vadd.f32 %v401, %v496
      %v530 = vmax.f32 %v498, 0.0
      %v531 = vmax.f32 %v499, 0.0
      %v532 = vmax.f32 %v500, 0.0
      %v533 = vmax.f32 %v501, 0.0
      %v534 = vmax.f32 %v502, 0.0
      %v535 = vmax.f32 %v503, 0.0
      %v536 = vmax.f32 %v504, 0.0
      %v537 = vmax.f32 %v505, 0.0
      %v538 = vmax.f32 %v506, 0.0
      %v539 = vmax.f32 %v507, 0.0
      %v540 = vmax.f32 %v508, 0.0
      %v541 = vmax.f32 %v509, 0.0
      %v542 = vmax.f32 %v510, 0.0
      %v543 = vmax.f32 %v511, 0.0
      %v544 = vmax.f32 %v512, 0.0
      %v545 = vmax.f32 %v513, 0.0
      %v546 = vmax.f32 %v514, 0.0
      %v547 = vmax.f32 %v515, 0.0
      %v548 = vmax.f32 %v516, 0.0
      %v549 = vmax.f32 %v517, 0.0
      %v550 = vmax.f32 %v518, 0.0
      %v551 = vmax.f32 %v519, 0.0
      %v552 = vmax.f32 %v520, 0.0
      %v553 = vmax.f32 %v521, 0.0
      %v554 = vmax.f32 %v522, 0.0
      %v555 = vmax.f32 %v523, 0.0
      %v556 = vmax.f32 %v524, 0.0
      %v557 = vmax.f32 %v525, 0.0
      %v558 = vmax.f32 %v526, 0.0
      %v559 = vmax.f32 %v527, 0.0
      %v560 = vmax.f32 %v528, 0.0
      %v561 = vmax.f32 %v529, 0.0
      %v562 = vpack.c.bf16 %v532, %v530
      %v563 = vpack.c.bf16 %v533, %v531
      %v564 = vpack.c.bf16 %v536, %v534
      %v565 = vpack.c.bf16 %v537, %v535
      %v566 = vpack.c.bf16 %v540, %v538
      %v567 = vpack.c.bf16 %v541, %v539
      %v568 = vpack.c.bf16 %v544, %v542
      %v569 = vpack.c.bf16 %v545, %v543
      %v570 = vpack.c.bf16 %v548, %v546
      %v571 = vpack.c.bf16 %v549, %v547
      %v572 = vpack.c.bf16 %v552, %v550
      %v573 = vpack.c.bf16 %v553, %v551
      %v574 = vpack.c.bf16 %v556, %v554
      %v575 = vpack.c.bf16 %v557, %v555
      %v576 = vpack.c.bf16 %v560, %v558
      %v577 = vpack.c.bf16 %v561, %v559
      %v578 = vld [vmem:[%s3] sm:$0xf]
      %v579 = vld [vmem:[%s3 + $0x4] sm:$0xf]
      %v580 = vld [vmem:[%s3 + $0x8] sm:$0xf]
      %v581 = vld [vmem:[%s3 + $0xc] sm:$0xf]
      %v582 = vld [vmem:[%s3 + $0x10] sm:$0xf]
      %v583 = vld [vmem:[%s3 + $0x14] sm:$0xf]
      %v584 = vld [vmem:[%s3 + $0x18] sm:$0xf]
      %v585 = vld [vmem:[%s3 + $0x1c] sm:$0xf]
      %v586 = vld [vmem:[%s3 + $0x20] sm:$0xf]
      %v587 = vld [vmem:[%s3 + $0x24] sm:$0xf]
      %v588 = vld [vmem:[%s3 + $0x28] sm:$0xf]
      %v589 = vld [vmem:[%s3 + $0x2c] sm:$0xf]
      %v602 = vunpack.c.l.b16 %v578
      %v603 = vunpack.c.l.b16 %v579
      %v604 = vunpack.c.l.b16 %v580
      %v605 = vunpack.c.l.b16 %v581
      %v606 = vunpack.c.l.b16 %v582
      %v607 = vunpack.c.l.b16 %v583
      %v608 = vunpack.c.l.b16 %v584
      %v609 = vunpack.c.l.b16 %v585
      %v610 = vunpack.c.l.b16 %v586
      %v611 = vunpack.c.l.b16 %v587
      %v612 = vunpack.c.l.b16 %v588
      %v613 = vunpack.c.l.b16 %v589
      %v614 = vpack.c.b16 %v603, %v602
      %v615 = vpack.c.b16 %v605, %v604
      %v616 = vpack.c.b16 %v607, %v606
      %v617 = vpack.c.b16 %v609, %v608
      %v618 = vpack.c.b16 %v611, %v610
      %v619 = vpack.c.b16 %v613, %v612
      %626 = vmatprep.subr.bf16.mxu0 %v577
      %627 = vmatpush1.bf16.msra.mxu0 %v576
      %628 = vmatprep.subr.bf16.mxu0 %v575
      %629 = vmatpush1.bf16.msra.mxu0 %v574
      %630 = vmatprep.subr.bf16.mxu0 %v573
      %631 = vmatpush1.bf16.msra.mxu0 %v572
      %632 = vmatprep.subr.bf16.mxu0 %v571
      %633 = vmatpush1.bf16.msra.mxu0 %v570
      %634 = vmatprep.subr.bf16.mxu0 %v569
      %635 = vmatpush1.bf16.msra.mxu0 %v568
      %636 = vmatprep.subr.bf16.mxu0 %v567
      %637 = vmatpush1.bf16.msra.mxu0 %v566
      %638 = vmatprep.subr.bf16.mxu0 %v565
      %639 = vmatpush1.bf16.msra.mxu0 %v564
      %640 = vmatprep.subr.bf16.mxu0 %v563
      %641 = vmatpush1.bf16.msra.mxu0 %v562
      %642 = vmatprep.subr.bf16.mxu0 0
      %643 = vmatpush2.bf16.msra.mxu0 0
      %644 = vmatprep.subr.bf16.mxu0 0
      %645 = vmatpush2.bf16.msra.mxu0 0
      %646 = vmatprep.subr.bf16.mxu0 0
      %647 = vmatpush2.bf16.msra.mxu0 0
      %648 = vmatprep.subr.bf16.mxu0 0
      %649 = vmatpush2.bf16.msra.mxu0 0
      %650 = vmatprep.subr.bf16.mxu0 0
      %651 = vmatpush2.bf16.msra.mxu0 0
      %652 = vmatprep.subr.bf16.mxu0 0
      %653 = vmatpush2.bf16.msra.mxu0 0
      %654 = vmatprep.subr.bf16.mxu0 0
      %655 = vmatpush2.bf16.msra.mxu0 0
      %656 = vmatprep.subr.bf16.mxu0 0
      %657 = vmatpush2.bf16.msra.mxu0 0
      %658 = vmatprep.mubr.bf16.mxu0 0
      %659 = vmatmul.mubr.bf16.gmra.mxu0 %v614
      %v660 = vpop.f32.mrf.mxu0
      %v661 = vadd.f32 0.0, %v660
      %v662 = vpop.f32.mrf.mxu0
      %v663 = vadd.f32 0.0, %v662
      %v664 = vpop.f32.mrf.mxu0
      %v665 = vadd.f32 0.0, %v664
      %v666 = vpop.f32.mrf.mxu0
      %v667 = vadd.f32 0.0, %v666
      %668 = vmatprep.mubr.bf16.mxu0 0
      %669 = vmatmul.mubr.bf16.gmra.mxu0 %v615
      %v670 = vpop.f32.mrf.mxu0
      %v671 = vadd.f32 0.0, %v670
      %v672 = vpop.f32.mrf.mxu0
      %v673 = vadd.f32 0.0, %v672
      %v674 = vpop.f32.mrf.mxu0
      %v675 = vadd.f32 0.0, %v674
      %v676 = vpop.f32.mrf.mxu0
      %v677 = vadd.f32 0.0, %v676
      %678 = vmatprep.mubr.bf16.mxu0 0
      %679 = vmatmul.mubr.bf16.gmra.mxu0 %v616
      %v680 = vpop.f32.mrf.mxu0
      %v681 = vadd.f32 0.0, %v680
      %v682 = vpop.f32.mrf.mxu0
      %v683 = vadd.f32 0.0, %v682
      %v684 = vpop.f32.mrf.mxu0
      %v685 = vadd.f32 0.0, %v684
      %v686 = vpop.f32.mrf.mxu0
      %v687 = vadd.f32 0.0, %v686
      %688 = vmatprep.mubr.bf16.mxu0 0
      %689 = vmatmul.mubr.bf16.gmra.mxu0 %v617
      %v690 = vpop.f32.mrf.mxu0
      %v691 = vadd.f32 0.0, %v690
      %v692 = vpop.f32.mrf.mxu0
      %v693 = vadd.f32 0.0, %v692
      %v694 = vpop.f32.mrf.mxu0
      %v695 = vadd.f32 0.0, %v694
      %v696 = vpop.f32.mrf.mxu0
      %v697 = vadd.f32 0.0, %v696
      %698 = vmatprep.mubr.bf16.mxu0 0
      %699 = vmatmul.mubr.bf16.gmra.mxu0 %v618
      %v700 = vpop.f32.mrf.mxu0
      %v701 = vadd.f32 0.0, %v700
      %v702 = vpop.f32.mrf.mxu0
      %v703 = vadd.f32 0.0, %v702
      %v704 = vpop.f32.mrf.mxu0
      %v705 = vadd.f32 0.0, %v704
      %v706 = vpop.f32.mrf.mxu0
      %v707 = vadd.f32 0.0, %v706
      %708 = vmatprep.mubr.bf16.mxu0 0
      %709 = vmatmul.mubr.bf16.gmra.mxu0 %v619
      %v710 = vpop.f32.mrf.mxu0
      %v711 = vadd.f32 0.0, %v710
      %v712 = vpop.f32.mrf.mxu0
      %v713 = vadd.f32 0.0, %v712
      %v714 = vpop.f32.mrf.mxu0
      %v715 = vadd.f32 0.0, %v714
      %v716 = vpop.f32.mrf.mxu0
      %v717 = vadd.f32 0.0, %v716
      %718 = vdwg.mxu0
      %719 = vrot.lane.b32.xlu0 %v661, 17
      %v720 = vpop.permute.xlu0 %719
      %721 = vrot.lane.b32.xlu0 %v665, 17
      %v722 = vpop.permute.xlu0 %721
      %723 = vrot.lane.b32.xlu0 %v671, 17
      %v724 = vpop.permute.xlu0 %723
      %725 = vrot.lane.b32.xlu0 %v675, 17
      %v726 = vpop.permute.xlu0 %725
      %727 = vrot.lane.b32.xlu0 %v663, 17
      %v728 = vpop.permute.xlu0 %727
      %729 = vrot.lane.b32.xlu0 %v667, 17
      %v730 = vpop.permute.xlu0 %729
      %731 = vrot.lane.b32.xlu0 %v673, 17
      %v732 = vpop.permute.xlu0 %731
      %733 = vrot.lane.b32.xlu0 %v677, 17
      %v734 = vpop.permute.xlu0 %733
      %v735 = vlaneseq
      %v736 = vand.u32 %v735, 127
      %vm737 = vcmp.lt.s32.totalorder %v736, 17
      %v738 = vsel %vm737, %v720, %v728
      %v739 = vsel %vm737, %v722, %v730
      %v740 = vsel %vm737, %v724, %v732
      %v741 = vsel %vm737, %v726, %v734
      %v742 = vsel %vm737, %v728, %v720
      %v743 = vsel %vm737, %v730, %v722
      %v744 = vsel %vm737, %v732, %v724
      %v745 = vsel %vm737, %v734, %v726
      %v746 = vld [vmem:[%s4] sm:$0x3]
      %v748 = vlaneseq
      %v749 = vshrl.u32 %v748, 7
      %v750 = vsub.s32 0, %v749
      %v751 = vrot.slane %v746, %v750
      %v752 = vlaneseq
      %v753 = vshrl.u32 %v752, 7
      %v754 = vsub.s32 1, %v753
      %v755 = vrot.slane %v746, %v754
      %v758 = vmul.f32 %v742, %v751
      %v759 = vmul.f32 %v738, %v755
      %v760 = vmul.f32 %v743, %v751
      %v761 = vmul.f32 %v739, %v755
      %v762 = vmul.f32 %v744, %v751
      %v763 = vmul.f32 %v740, %v755
      %v764 = vmul.f32 %v745, %v751
      %v765 = vmul.f32 %v741, %v755
      %v766 = vadd.f32 %v758, 0.0
      %v767 = vadd.f32 %v759, 0.0
      %v768 = vadd.f32 %v760, 0.0
      %v769 = vadd.f32 %v761, 0.0
      %v770 = vadd.f32 %v762, 0.0
      %v771 = vadd.f32 %v763, 0.0
      %v772 = vadd.f32 %v764, 0.0
      %v773 = vadd.f32 %v765, 0.0
      %774 = vrot.lane.b32.xlu0 %v681, 16
      %v775 = vpop.permute.xlu0 %774
      %776 = vrot.lane.b32.xlu0 %v685, 16
      %v777 = vpop.permute.xlu0 %776
      %778 = vrot.lane.b32.xlu0 %v691, 16
      %v779 = vpop.permute.xlu0 %778
      %780 = vrot.lane.b32.xlu0 %v695, 16
      %v781 = vpop.permute.xlu0 %780
      %782 = vrot.lane.b32.xlu0 %v683, 16
      %v783 = vpop.permute.xlu0 %782
      %784 = vrot.lane.b32.xlu0 %v687, 16
      %v785 = vpop.permute.xlu0 %784
      %786 = vrot.lane.b32.xlu0 %v693, 16
      %v787 = vpop.permute.xlu0 %786
      %788 = vrot.lane.b32.xlu0 %v697, 16
      %v789 = vpop.permute.xlu0 %788
      %vm790 = vcmp.lt.s32.totalorder %v736, 16
      %v791 = vsel %vm790, %v775, %v783
      %v792 = vsel %vm790, %v777, %v785
      %v793 = vsel %vm790, %v779, %v787
      %v794 = vsel %vm790, %v781, %v789
      %v795 = vsel %vm790, %v783, %v775
      %v796 = vsel %vm790, %v785, %v777
      %v797 = vsel %vm790, %v787, %v779
      %v798 = vsel %vm790, %v789, %v781
      %s799 = scalar_lea.vmem %s4, 2
      %v800 = vld [vmem:[%s799] sm:$0x3]
      %v802 = vlaneseq
      %v803 = vshrl.u32 %v802, 7
      %v804 = vsub.s32 0, %v803
      %v805 = vrot.slane %v800, %v804
      %v806 = vlaneseq
      %v807 = vshrl.u32 %v806, 7
      %v808 = vsub.s32 1, %v807
      %v809 = vrot.slane %v800, %v808
      %v812 = vmul.f32 %v795, %v805
      %v813 = vmul.f32 %v791, %v809
      %v814 = vmul.f32 %v796, %v805
      %v815 = vmul.f32 %v792, %v809
      %v816 = vmul.f32 %v797, %v805
      %v817 = vmul.f32 %v793, %v809
      %v818 = vmul.f32 %v798, %v805
      %v819 = vmul.f32 %v794, %v809
      %v820 = vadd.f32 %v766, %v812
      %v821 = vadd.f32 %v767, %v813
      %v822 = vadd.f32 %v768, %v814
      %v823 = vadd.f32 %v769, %v815
      %v824 = vadd.f32 %v770, %v816
      %v825 = vadd.f32 %v771, %v817
      %v826 = vadd.f32 %v772, %v818
      %v827 = vadd.f32 %v773, %v819
      %828 = vrot.lane.b32.xlu0 %v701, 15
      %v829 = vpop.permute.xlu0 %828
      %830 = vrot.lane.b32.xlu0 %v705, 15
      %v831 = vpop.permute.xlu0 %830
      %832 = vrot.lane.b32.xlu0 %v711, 15
      %v833 = vpop.permute.xlu0 %832
      %834 = vrot.lane.b32.xlu0 %v715, 15
      %v835 = vpop.permute.xlu0 %834
      %836 = vrot.lane.b32.xlu0 %v703, 15
      %v837 = vpop.permute.xlu0 %836
      %838 = vrot.lane.b32.xlu0 %v707, 15
      %v839 = vpop.permute.xlu0 %838
      %840 = vrot.lane.b32.xlu0 %v713, 15
      %v841 = vpop.permute.xlu0 %840
      %842 = vrot.lane.b32.xlu0 %v717, 15
      %v843 = vpop.permute.xlu0 %842
      %vm844 = vcmp.lt.s32.totalorder %v736, 15
      %v845 = vsel %vm844, %v829, %v837
      %v846 = vsel %vm844, %v831, %v839
      %v847 = vsel %vm844, %v833, %v841
      %v848 = vsel %vm844, %v835, %v843
      %v849 = vsel %vm844, %v837, %v829
      %v850 = vsel %vm844, %v839, %v831
      %v851 = vsel %vm844, %v841, %v833
      %v852 = vsel %vm844, %v843, %v835
      %s853 = scalar_lea.vmem %s4, 4
      %v854 = vld [vmem:[%s853] sm:$0x3]
      %v856 = vlaneseq
      %v857 = vshrl.u32 %v856, 7
      %v858 = vsub.s32 0, %v857
      %v859 = vrot.slane %v854, %v858
      %v860 = vlaneseq
      %v861 = vshrl.u32 %v860, 7
      %v862 = vsub.s32 1, %v861
      %v863 = vrot.slane %v854, %v862
      %v866 = vmul.f32 %v849, %v859
      %v867 = vmul.f32 %v845, %v863
      %v868 = vmul.f32 %v850, %v859
      %v869 = vmul.f32 %v846, %v863
      %v870 = vmul.f32 %v851, %v859
      %v871 = vmul.f32 %v847, %v863
      %v872 = vmul.f32 %v852, %v859
      %v873 = vmul.f32 %v848, %v863
      %v874 = vadd.f32 %v820, %v866
      %v875 = vadd.f32 %v821, %v867
      %v876 = vadd.f32 %v822, %v868
      %v877 = vadd.f32 %v823, %v869
      %v878 = vadd.f32 %v824, %v870
      %v879 = vadd.f32 %v825, %v871
      %v880 = vadd.f32 %v826, %v872
      %v881 = vadd.f32 %v827, %v873
      %s882 = scalar_lea.vmem %s3, 48
      %v883 = vld [vmem:[%s882] sm:$0xf]
      %v884 = vld [vmem:[%s882 + $0x4] sm:$0xf]
      %v885 = vld [vmem:[%s882 + $0x8] sm:$0xf]
      %v886 = vld [vmem:[%s882 + $0xc] sm:$0xf]
      %v887 = vld [vmem:[%s882 + $0x10] sm:$0xf]
      %v888 = vld [vmem:[%s882 + $0x14] sm:$0xf]
      %v889 = vld [vmem:[%s882 + $0x18] sm:$0xf]
      %v890 = vld [vmem:[%s882 + $0x1c] sm:$0xf]
      %v891 = vld [vmem:[%s882 + $0x20] sm:$0xf]
      %v892 = vld [vmem:[%s882 + $0x24] sm:$0xf]
      %v893 = vld [vmem:[%s882 + $0x28] sm:$0xf]
      %v894 = vld [vmem:[%s882 + $0x2c] sm:$0xf]
      %v907 = vunpack.c.l.b16 %v883
      %v908 = vunpack.c.l.b16 %v884
      %v909 = vunpack.c.l.b16 %v885
      %v910 = vunpack.c.l.b16 %v886
      %v911 = vunpack.c.l.b16 %v887
      %v912 = vunpack.c.l.b16 %v888
      %v913 = vunpack.c.l.b16 %v889
      %v914 = vunpack.c.l.b16 %v890
      %v915 = vunpack.c.l.b16 %v891
      %v916 = vunpack.c.l.b16 %v892
      %v917 = vunpack.c.l.b16 %v893
      %v918 = vunpack.c.l.b16 %v894
      %v919 = vpack.c.b16 %v908, %v907
      %v920 = vpack.c.b16 %v910, %v909
      %v921 = vpack.c.b16 %v912, %v911
      %v922 = vpack.c.b16 %v914, %v913
      %v923 = vpack.c.b16 %v916, %v915
      %v924 = vpack.c.b16 %v918, %v917
      %931 = vmatprep.subr.bf16.mxu0 %v577
      %932 = vmatpush1.bf16.msra.mxu0 %v576
      %933 = vmatprep.subr.bf16.mxu0 %v575
      %934 = vmatpush1.bf16.msra.mxu0 %v574
      %935 = vmatprep.subr.bf16.mxu0 %v573
      %936 = vmatpush1.bf16.msra.mxu0 %v572
      %937 = vmatprep.subr.bf16.mxu0 %v571
      %938 = vmatpush1.bf16.msra.mxu0 %v570
      %939 = vmatprep.subr.bf16.mxu0 %v569
      %940 = vmatpush1.bf16.msra.mxu0 %v568
      %941 = vmatprep.subr.bf16.mxu0 %v567
      %942 = vmatpush1.bf16.msra.mxu0 %v566
      %943 = vmatprep.subr.bf16.mxu0 %v565
      %944 = vmatpush1.bf16.msra.mxu0 %v564
      %945 = vmatprep.subr.bf16.mxu0 %v563
      %946 = vmatpush1.bf16.msra.mxu0 %v562
      %947 = vmatprep.subr.bf16.mxu0 0
      %948 = vmatpush2.bf16.msra.mxu0 0
      %949 = vmatprep.subr.bf16.mxu0 0
      %950 = vmatpush2.bf16.msra.mxu0 0
      %951 = vmatprep.subr.bf16.mxu0 0
      %952 = vmatpush2.bf16.msra.mxu0 0
      %953 = vmatprep.subr.bf16.mxu0 0
      %954 = vmatpush2.bf16.msra.mxu0 0
      %955 = vmatprep.subr.bf16.mxu0 0
      %956 = vmatpush2.bf16.msra.mxu0 0
      %957 = vmatprep.subr.bf16.mxu0 0
      %958 = vmatpush2.bf16.msra.mxu0 0
      %959 = vmatprep.subr.bf16.mxu0 0
      %960 = vmatpush2.bf16.msra.mxu0 0
      %961 = vmatprep.subr.bf16.mxu0 0
      %962 = vmatpush2.bf16.msra.mxu0 0
      %963 = vmatprep.mubr.bf16.mxu0 0
      %964 = vmatmul.mubr.bf16.gmra.mxu0 %v919
      %v965 = vpop.f32.mrf.mxu0
      %v966 = vadd.f32 0.0, %v965
      %v967 = vpop.f32.mrf.mxu0
      %v968 = vadd.f32 0.0, %v967
      %v969 = vpop.f32.mrf.mxu0
      %v970 = vadd.f32 0.0, %v969
      %v971 = vpop.f32.mrf.mxu0
      %v972 = vadd.f32 0.0, %v971
      %973 = vmatprep.mubr.bf16.mxu0 0
      %974 = vmatmul.mubr.bf16.gmra.mxu0 %v920
      %v975 = vpop.f32.mrf.mxu0
      %v976 = vadd.f32 0.0, %v975
      %v977 = vpop.f32.mrf.mxu0
      %v978 = vadd.f32 0.0, %v977
      %v979 = vpop.f32.mrf.mxu0
      %v980 = vadd.f32 0.0, %v979
      %v981 = vpop.f32.mrf.mxu0
      %v982 = vadd.f32 0.0, %v981
      %983 = vmatprep.mubr.bf16.mxu0 0
      %984 = vmatmul.mubr.bf16.gmra.mxu0 %v921
      %v985 = vpop.f32.mrf.mxu0
      %v986 = vadd.f32 0.0, %v985
      %v987 = vpop.f32.mrf.mxu0
      %v988 = vadd.f32 0.0, %v987
      %v989 = vpop.f32.mrf.mxu0
      %v990 = vadd.f32 0.0, %v989
      %v991 = vpop.f32.mrf.mxu0
      %v992 = vadd.f32 0.0, %v991
      %993 = vmatprep.mubr.bf16.mxu0 0
      %994 = vmatmul.mubr.bf16.gmra.mxu0 %v922
      %v995 = vpop.f32.mrf.mxu0
      %v996 = vadd.f32 0.0, %v995
      %v997 = vpop.f32.mrf.mxu0
      %v998 = vadd.f32 0.0, %v997
      %v999 = vpop.f32.mrf.mxu0
      %v1000 = vadd.f32 0.0, %v999
      %v1001 = vpop.f32.mrf.mxu0
      %v1002 = vadd.f32 0.0, %v1001
      %1003 = vmatprep.mubr.bf16.mxu0 0
      %1004 = vmatmul.mubr.bf16.gmra.mxu0 %v923
      %v1005 = vpop.f32.mrf.mxu0
      %v1006 = vadd.f32 0.0, %v1005
      %v1007 = vpop.f32.mrf.mxu0
      %v1008 = vadd.f32 0.0, %v1007
      %v1009 = vpop.f32.mrf.mxu0
      %v1010 = vadd.f32 0.0, %v1009
      %v1011 = vpop.f32.mrf.mxu0
      %v1012 = vadd.f32 0.0, %v1011
      %1013 = vmatprep.mubr.bf16.mxu0 0
      %1014 = vmatmul.mubr.bf16.gmra.mxu0 %v924
      %v1015 = vpop.f32.mrf.mxu0
      %v1016 = vadd.f32 0.0, %v1015
      %v1017 = vpop.f32.mrf.mxu0
      %v1018 = vadd.f32 0.0, %v1017
      %v1019 = vpop.f32.mrf.mxu0
      %v1020 = vadd.f32 0.0, %v1019
      %v1021 = vpop.f32.mrf.mxu0
      %v1022 = vadd.f32 0.0, %v1021
      %1023 = vdwg.mxu0
      %1024 = vrot.lane.b32.xlu0 %v966, 1
      %v1025 = vpop.permute.xlu0 %1024
      %1026 = vrot.lane.b32.xlu0 %v970, 1
      %v1027 = vpop.permute.xlu0 %1026
      %1028 = vrot.lane.b32.xlu0 %v976, 1
      %v1029 = vpop.permute.xlu0 %1028
      %1030 = vrot.lane.b32.xlu0 %v980, 1
      %v1031 = vpop.permute.xlu0 %1030
      %1032 = vrot.lane.b32.xlu0 %v968, 1
      %v1033 = vpop.permute.xlu0 %1032
      %1034 = vrot.lane.b32.xlu0 %v972, 1
      %v1035 = vpop.permute.xlu0 %1034
      %1036 = vrot.lane.b32.xlu0 %v978, 1
      %v1037 = vpop.permute.xlu0 %1036
      %1038 = vrot.lane.b32.xlu0 %v982, 1
      %v1039 = vpop.permute.xlu0 %1038
      %vm1040 = vcmp.lt.s32.totalorder %v736, 1
      %v1041 = vsel %vm1040, %v1025, %v1033
      %v1042 = vsel %vm1040, %v1027, %v1035
      %v1043 = vsel %vm1040, %v1029, %v1037
      %v1044 = vsel %vm1040, %v1031, %v1039
      %v1045 = vsel %vm1040, %v1033, %v1025
      %v1046 = vsel %vm1040, %v1035, %v1027
      %v1047 = vsel %vm1040, %v1037, %v1029
      %v1048 = vsel %vm1040, %v1039, %v1031
      %s1049 = scalar_lea.vmem %s4, 6
      %v1050 = vld [vmem:[%s1049] sm:$0x3]
      %v1052 = vlaneseq
      %v1053 = vshrl.u32 %v1052, 7
      %v1054 = vsub.s32 0, %v1053
      %v1055 = vrot.slane %v1050, %v1054
      %v1056 = vlaneseq
      %v1057 = vshrl.u32 %v1056, 7
      %v1058 = vsub.s32 1, %v1057
      %v1059 = vrot.slane %v1050, %v1058
      %v1062 = vmul.f32 %v1045, %v1055
      %v1063 = vmul.f32 %v1041, %v1059
      %v1064 = vmul.f32 %v1046, %v1055
      %v1065 = vmul.f32 %v1042, %v1059
      %v1066 = vmul.f32 %v1047, %v1055
      %v1067 = vmul.f32 %v1043, %v1059
      %v1068 = vmul.f32 %v1048, %v1055
      %v1069 = vmul.f32 %v1044, %v1059
      %v1070 = vadd.f32 %v874, %v1062
      %v1071 = vadd.f32 %v875, %v1063
      %v1072 = vadd.f32 %v876, %v1064
      %v1073 = vadd.f32 %v877, %v1065
      %v1074 = vadd.f32 %v878, %v1066
      %v1075 = vadd.f32 %v879, %v1067
      %v1076 = vadd.f32 %v880, %v1068
      %v1077 = vadd.f32 %v881, %v1069
      %s1078 = scalar_lea.vmem %s4, 8
      %v1079 = vld [vmem:[%s1078] sm:$0x3]
      %v1081 = vlaneseq
      %v1082 = vshrl.u32 %v1081, 7
      %v1083 = vsub.s32 0, %v1082
      %v1084 = vrot.slane %v1079, %v1083
      %v1085 = vlaneseq
      %v1086 = vshrl.u32 %v1085, 7
      %v1087 = vsub.s32 1, %v1086
      %v1088 = vrot.slane %v1079, %v1087
      %v1091 = vmul.f32 %v986, %v1084
      %v1092 = vmul.f32 %v988, %v1088
      %v1093 = vmul.f32 %v990, %v1084
      %v1094 = vmul.f32 %v992, %v1088
      %v1095 = vmul.f32 %v996, %v1084
      %v1096 = vmul.f32 %v998, %v1088
      %v1097 = vmul.f32 %v1000, %v1084
      %v1098 = vmul.f32 %v1002, %v1088
      %v1099 = vadd.f32 %v1070, %v1091
      %v1100 = vadd.f32 %v1071, %v1092
      %v1101 = vadd.f32 %v1072, %v1093
      %v1102 = vadd.f32 %v1073, %v1094
      %v1103 = vadd.f32 %v1074, %v1095
      %v1104 = vadd.f32 %v1075, %v1096
      %v1105 = vadd.f32 %v1076, %v1097
      %v1106 = vadd.f32 %v1077, %v1098
      %1107 = vrot.lane.b32.xlu0 %v1006, 127
      %v1108 = vpop.permute.xlu0 %1107
      %1109 = vrot.lane.b32.xlu0 %v1010, 127
      %v1110 = vpop.permute.xlu0 %1109
      %1111 = vrot.lane.b32.xlu0 %v1016, 127
      %v1112 = vpop.permute.xlu0 %1111
      %1113 = vrot.lane.b32.xlu0 %v1020, 127
      %v1114 = vpop.permute.xlu0 %1113
      %1115 = vrot.lane.b32.xlu0 %v1008, 127
      %v1116 = vpop.permute.xlu0 %1115
      %1117 = vrot.lane.b32.xlu0 %v1012, 127
      %v1118 = vpop.permute.xlu0 %1117
      %1119 = vrot.lane.b32.xlu0 %v1018, 127
      %v1120 = vpop.permute.xlu0 %1119
      %1121 = vrot.lane.b32.xlu0 %v1022, 127
      %v1122 = vpop.permute.xlu0 %1121
      %vm1123 = vcmp.lt.s32.totalorder %v736, 127
      %v1124 = vsel %vm1123, %v1108, %v1116
      %v1125 = vsel %vm1123, %v1110, %v1118
      %v1126 = vsel %vm1123, %v1112, %v1120
      %v1127 = vsel %vm1123, %v1114, %v1122
      %v1128 = vsel %vm1123, %v1116, %v1108
      %v1129 = vsel %vm1123, %v1118, %v1110
      %v1130 = vsel %vm1123, %v1120, %v1112
      %v1131 = vsel %vm1123, %v1122, %v1114
      %s1132 = scalar_lea.vmem %s4, 10
      %v1133 = vld [vmem:[%s1132] sm:$0x3]
      %v1135 = vlaneseq
      %v1136 = vshrl.u32 %v1135, 7
      %v1137 = vsub.s32 0, %v1136
      %v1138 = vrot.slane %v1133, %v1137
      %v1139 = vlaneseq
      %v1140 = vshrl.u32 %v1139, 7
      %v1141 = vsub.s32 1, %v1140
      %v1142 = vrot.slane %v1133, %v1141
      %v1145 = vmul.f32 %v1124, %v1138
      %v1146 = vmul.f32 %v1128, %v1142
      %v1147 = vmul.f32 %v1125, %v1138
      %v1148 = vmul.f32 %v1129, %v1142
      %v1149 = vmul.f32 %v1126, %v1138
      %v1150 = vmul.f32 %v1130, %v1142
      %v1151 = vmul.f32 %v1127, %v1138
      %v1152 = vmul.f32 %v1131, %v1142
      %v1153 = vadd.f32 %v1099, %v1145
      %v1154 = vadd.f32 %v1100, %v1146
      %v1155 = vadd.f32 %v1101, %v1147
      %v1156 = vadd.f32 %v1102, %v1148
      %v1157 = vadd.f32 %v1103, %v1149
      %v1158 = vadd.f32 %v1104, %v1150
      %v1159 = vadd.f32 %v1105, %v1151
      %v1160 = vadd.f32 %v1106, %v1152
      %s1161 = scalar_lea.vmem %s3, 96
      %v1162 = vld [vmem:[%s1161] sm:$0xf]
      %v1163 = vld [vmem:[%s1161 + $0x4] sm:$0xf]
      %v1164 = vld [vmem:[%s1161 + $0x8] sm:$0xf]
      %v1165 = vld [vmem:[%s1161 + $0xc] sm:$0xf]
      %v1166 = vld [vmem:[%s1161 + $0x10] sm:$0xf]
      %v1167 = vld [vmem:[%s1161 + $0x14] sm:$0xf]
      %v1168 = vld [vmem:[%s1161 + $0x18] sm:$0xf]
      %v1169 = vld [vmem:[%s1161 + $0x1c] sm:$0xf]
      %v1170 = vld [vmem:[%s1161 + $0x20] sm:$0xf]
      %v1171 = vld [vmem:[%s1161 + $0x24] sm:$0xf]
      %v1172 = vld [vmem:[%s1161 + $0x28] sm:$0xf]
      %v1173 = vld [vmem:[%s1161 + $0x2c] sm:$0xf]
      %v1186 = vunpack.c.l.b16 %v1162
      %v1187 = vunpack.c.l.b16 %v1163
      %v1188 = vunpack.c.l.b16 %v1164
      %v1189 = vunpack.c.l.b16 %v1165
      %v1190 = vunpack.c.l.b16 %v1166
      %v1191 = vunpack.c.l.b16 %v1167
      %v1192 = vunpack.c.l.b16 %v1168
      %v1193 = vunpack.c.l.b16 %v1169
      %v1194 = vunpack.c.l.b16 %v1170
      %v1195 = vunpack.c.l.b16 %v1171
      %v1196 = vunpack.c.l.b16 %v1172
      %v1197 = vunpack.c.l.b16 %v1173
      %v1198 = vpack.c.b16 %v1187, %v1186
      %v1199 = vpack.c.b16 %v1189, %v1188
      %v1200 = vpack.c.b16 %v1191, %v1190
      %v1201 = vpack.c.b16 %v1193, %v1192
      %v1202 = vpack.c.b16 %v1195, %v1194
      %v1203 = vpack.c.b16 %v1197, %v1196
      %1210 = vmatprep.subr.bf16.mxu0 %v577
      %1211 = vmatpush1.bf16.msra.mxu0 %v576
      %1212 = vmatprep.subr.bf16.mxu0 %v575
      %1213 = vmatpush1.bf16.msra.mxu0 %v574
      %1214 = vmatprep.subr.bf16.mxu0 %v573
      %1215 = vmatpush1.bf16.msra.mxu0 %v572
      %1216 = vmatprep.subr.bf16.mxu0 %v571
      %1217 = vmatpush1.bf16.msra.mxu0 %v570
      %1218 = vmatprep.subr.bf16.mxu0 %v569
      %1219 = vmatpush1.bf16.msra.mxu0 %v568
      %1220 = vmatprep.subr.bf16.mxu0 %v567
      %1221 = vmatpush1.bf16.msra.mxu0 %v566
      %1222 = vmatprep.subr.bf16.mxu0 %v565
      %1223 = vmatpush1.bf16.msra.mxu0 %v564
      %1224 = vmatprep.subr.bf16.mxu0 %v563
      %1225 = vmatpush1.bf16.msra.mxu0 %v562
      %1226 = vmatprep.subr.bf16.mxu0 0
      %1227 = vmatpush2.bf16.msra.mxu0 0
      %1228 = vmatprep.subr.bf16.mxu0 0
      %1229 = vmatpush2.bf16.msra.mxu0 0
      %1230 = vmatprep.subr.bf16.mxu0 0
      %1231 = vmatpush2.bf16.msra.mxu0 0
      %1232 = vmatprep.subr.bf16.mxu0 0
      %1233 = vmatpush2.bf16.msra.mxu0 0
      %1234 = vmatprep.subr.bf16.mxu0 0
      %1235 = vmatpush2.bf16.msra.mxu0 0
      %1236 = vmatprep.subr.bf16.mxu0 0
      %1237 = vmatpush2.bf16.msra.mxu0 0
      %1238 = vmatprep.subr.bf16.mxu0 0
      %1239 = vmatpush2.bf16.msra.mxu0 0
      %1240 = vmatprep.subr.bf16.mxu0 0
      %1241 = vmatpush2.bf16.msra.mxu0 0
      %1242 = vmatprep.mubr.bf16.mxu0 0
      %1243 = vmatmul.mubr.bf16.gmra.mxu0 %v1198
      %v1244 = vpop.f32.mrf.mxu0
      %v1245 = vadd.f32 0.0, %v1244
      %v1246 = vpop.f32.mrf.mxu0
      %v1247 = vadd.f32 0.0, %v1246
      %v1248 = vpop.f32.mrf.mxu0
      %v1249 = vadd.f32 0.0, %v1248
      %v1250 = vpop.f32.mrf.mxu0
      %v1251 = vadd.f32 0.0, %v1250
      %1252 = vmatprep.mubr.bf16.mxu0 0
      %1253 = vmatmul.mubr.bf16.gmra.mxu0 %v1199
      %v1254 = vpop.f32.mrf.mxu0
      %v1255 = vadd.f32 0.0, %v1254
      %v1256 = vpop.f32.mrf.mxu0
      %v1257 = vadd.f32 0.0, %v1256
      %v1258 = vpop.f32.mrf.mxu0
      %v1259 = vadd.f32 0.0, %v1258
      %v1260 = vpop.f32.mrf.mxu0
      %v1261 = vadd.f32 0.0, %v1260
      %1262 = vmatprep.mubr.bf16.mxu0 0
      %1263 = vmatmul.mubr.bf16.gmra.mxu0 %v1200
      %v1264 = vpop.f32.mrf.mxu0
      %v1265 = vadd.f32 0.0, %v1264
      %v1266 = vpop.f32.mrf.mxu0
      %v1267 = vadd.f32 0.0, %v1266
      %v1268 = vpop.f32.mrf.mxu0
      %v1269 = vadd.f32 0.0, %v1268
      %v1270 = vpop.f32.mrf.mxu0
      %v1271 = vadd.f32 0.0, %v1270
      %1272 = vmatprep.mubr.bf16.mxu0 0
      %1273 = vmatmul.mubr.bf16.gmra.mxu0 %v1201
      %v1274 = vpop.f32.mrf.mxu0
      %v1275 = vadd.f32 0.0, %v1274
      %v1276 = vpop.f32.mrf.mxu0
      %v1277 = vadd.f32 0.0, %v1276
      %v1278 = vpop.f32.mrf.mxu0
      %v1279 = vadd.f32 0.0, %v1278
      %v1280 = vpop.f32.mrf.mxu0
      %v1281 = vadd.f32 0.0, %v1280
      %1282 = vmatprep.mubr.bf16.mxu0 0
      %1283 = vmatmul.mubr.bf16.gmra.mxu0 %v1202
      %v1284 = vpop.f32.mrf.mxu0
      %v1285 = vadd.f32 0.0, %v1284
      %v1286 = vpop.f32.mrf.mxu0
      %v1287 = vadd.f32 0.0, %v1286
      %v1288 = vpop.f32.mrf.mxu0
      %v1289 = vadd.f32 0.0, %v1288
      %v1290 = vpop.f32.mrf.mxu0
      %v1291 = vadd.f32 0.0, %v1290
      %1292 = vmatprep.mubr.bf16.mxu0 0
      %1293 = vmatmul.mubr.bf16.gmra.mxu0 %v1203
      %v1294 = vpop.f32.mrf.mxu0
      %v1295 = vadd.f32 0.0, %v1294
      %v1296 = vpop.f32.mrf.mxu0
      %v1297 = vadd.f32 0.0, %v1296
      %v1298 = vpop.f32.mrf.mxu0
      %v1299 = vadd.f32 0.0, %v1298
      %v1300 = vpop.f32.mrf.mxu0
      %v1301 = vadd.f32 0.0, %v1300
      %1302 = vdwg.mxu0
      %1303 = vrot.lane.b32.xlu0 %v1245, 113
      %v1304 = vpop.permute.xlu0 %1303
      %1305 = vrot.lane.b32.xlu0 %v1249, 113
      %v1306 = vpop.permute.xlu0 %1305
      %1307 = vrot.lane.b32.xlu0 %v1255, 113
      %v1308 = vpop.permute.xlu0 %1307
      %1309 = vrot.lane.b32.xlu0 %v1259, 113
      %v1310 = vpop.permute.xlu0 %1309
      %1311 = vrot.lane.b32.xlu0 %v1247, 113
      %v1312 = vpop.permute.xlu0 %1311
      %1313 = vrot.lane.b32.xlu0 %v1251, 113
      %v1314 = vpop.permute.xlu0 %1313
      %1315 = vrot.lane.b32.xlu0 %v1257, 113
      %v1316 = vpop.permute.xlu0 %1315
      %1317 = vrot.lane.b32.xlu0 %v1261, 113
      %v1318 = vpop.permute.xlu0 %1317
      %vm1319 = vcmp.lt.s32.totalorder %v736, 113
      %v1320 = vsel %vm1319, %v1304, %v1312
      %v1321 = vsel %vm1319, %v1306, %v1314
      %v1322 = vsel %vm1319, %v1308, %v1316
      %v1323 = vsel %vm1319, %v1310, %v1318
      %v1324 = vsel %vm1319, %v1312, %v1304
      %v1325 = vsel %vm1319, %v1314, %v1306
      %v1326 = vsel %vm1319, %v1316, %v1308
      %v1327 = vsel %vm1319, %v1318, %v1310
      %s1328 = scalar_lea.vmem %s4, 12
      %v1329 = vld [vmem:[%s1328] sm:$0x3]
      %v1331 = vlaneseq
      %v1332 = vshrl.u32 %v1331, 7
      %v1333 = vsub.s32 0, %v1332
      %v1334 = vrot.slane %v1329, %v1333
      %v1335 = vlaneseq
      %v1336 = vshrl.u32 %v1335, 7
      %v1337 = vsub.s32 1, %v1336
      %v1338 = vrot.slane %v1329, %v1337
      %v1341 = vmul.f32 %v1320, %v1334
      %v1342 = vmul.f32 %v1324, %v1338
      %v1343 = vmul.f32 %v1321, %v1334
      %v1344 = vmul.f32 %v1325, %v1338
      %v1345 = vmul.f32 %v1322, %v1334
      %v1346 = vmul.f32 %v1326, %v1338
      %v1347 = vmul.f32 %v1323, %v1334
      %v1348 = vmul.f32 %v1327, %v1338
      %v1349 = vadd.f32 %v1153, %v1341
      %v1350 = vadd.f32 %v1154, %v1342
      %v1351 = vadd.f32 %v1155, %v1343
      %v1352 = vadd.f32 %v1156, %v1344
      %v1353 = vadd.f32 %v1157, %v1345
      %v1354 = vadd.f32 %v1158, %v1346
      %v1355 = vadd.f32 %v1159, %v1347
      %v1356 = vadd.f32 %v1160, %v1348
      %1357 = vrot.lane.b32.xlu0 %v1265, 112
      %v1358 = vpop.permute.xlu0 %1357
      %1359 = vrot.lane.b32.xlu0 %v1269, 112
      %v1360 = vpop.permute.xlu0 %1359
      %1361 = vrot.lane.b32.xlu0 %v1275, 112
      %v1362 = vpop.permute.xlu0 %1361
      %1363 = vrot.lane.b32.xlu0 %v1279, 112
      %v1364 = vpop.permute.xlu0 %1363
      %1365 = vrot.lane.b32.xlu0 %v1267, 112
      %v1366 = vpop.permute.xlu0 %1365
      %1367 = vrot.lane.b32.xlu0 %v1271, 112
      %v1368 = vpop.permute.xlu0 %1367
      %1369 = vrot.lane.b32.xlu0 %v1277, 112
      %v1370 = vpop.permute.xlu0 %1369
      %1371 = vrot.lane.b32.xlu0 %v1281, 112
      %v1372 = vpop.permute.xlu0 %1371
      %vm1373 = vcmp.lt.s32.totalorder %v736, 112
      %v1374 = vsel %vm1373, %v1358, %v1366
      %v1375 = vsel %vm1373, %v1360, %v1368
      %v1376 = vsel %vm1373, %v1362, %v1370
      %v1377 = vsel %vm1373, %v1364, %v1372
      %v1378 = vsel %vm1373, %v1366, %v1358
      %v1379 = vsel %vm1373, %v1368, %v1360
      %v1380 = vsel %vm1373, %v1370, %v1362
      %v1381 = vsel %vm1373, %v1372, %v1364
      %s1382 = scalar_lea.vmem %s4, 14
      %v1383 = vld [vmem:[%s1382] sm:$0x3]
      %v1385 = vlaneseq
      %v1386 = vshrl.u32 %v1385, 7
      %v1387 = vsub.s32 0, %v1386
      %v1388 = vrot.slane %v1383, %v1387
      %v1389 = vlaneseq
      %v1390 = vshrl.u32 %v1389, 7
      %v1391 = vsub.s32 1, %v1390
      %v1392 = vrot.slane %v1383, %v1391
      %v1395 = vmul.f32 %v1374, %v1388
      %v1396 = vmul.f32 %v1378, %v1392
      %v1397 = vmul.f32 %v1375, %v1388
      %v1398 = vmul.f32 %v1379, %v1392
      %v1399 = vmul.f32 %v1376, %v1388
      %v1400 = vmul.f32 %v1380, %v1392
      %v1401 = vmul.f32 %v1377, %v1388
      %v1402 = vmul.f32 %v1381, %v1392
      %v1403 = vadd.f32 %v1349, %v1395
      %v1404 = vadd.f32 %v1350, %v1396
      %v1405 = vadd.f32 %v1351, %v1397
      %v1406 = vadd.f32 %v1352, %v1398
      %v1407 = vadd.f32 %v1353, %v1399
      %v1408 = vadd.f32 %v1354, %v1400
      %v1409 = vadd.f32 %v1355, %v1401
      %v1410 = vadd.f32 %v1356, %v1402
      %1411 = vrot.lane.b32.xlu0 %v1285, 111
      %v1412 = vpop.permute.xlu0 %1411
      %1413 = vrot.lane.b32.xlu0 %v1289, 111
      %v1414 = vpop.permute.xlu0 %1413
      %1415 = vrot.lane.b32.xlu0 %v1295, 111
      %v1416 = vpop.permute.xlu0 %1415
      %1417 = vrot.lane.b32.xlu0 %v1299, 111
      %v1418 = vpop.permute.xlu0 %1417
      %1419 = vrot.lane.b32.xlu0 %v1287, 111
      %v1420 = vpop.permute.xlu0 %1419
      %1421 = vrot.lane.b32.xlu0 %v1291, 111
      %v1422 = vpop.permute.xlu0 %1421
      %1423 = vrot.lane.b32.xlu0 %v1297, 111
      %v1424 = vpop.permute.xlu0 %1423
      %1425 = vrot.lane.b32.xlu0 %v1301, 111
      %v1426 = vpop.permute.xlu0 %1425
      %vm1427 = vcmp.lt.s32.totalorder %v736, 111
      %v1428 = vsel %vm1427, %v1412, %v1420
      %v1429 = vsel %vm1427, %v1414, %v1422
      %v1430 = vsel %vm1427, %v1416, %v1424
      %v1431 = vsel %vm1427, %v1418, %v1426
      %v1432 = vsel %vm1427, %v1420, %v1412
      %v1433 = vsel %vm1427, %v1422, %v1414
      %v1434 = vsel %vm1427, %v1424, %v1416
      %v1435 = vsel %vm1427, %v1426, %v1418
      %s1436 = scalar_lea.vmem %s4, 16
      %v1437 = vld [vmem:[%s1436] sm:$0x3]
      %v1439 = vlaneseq
      %v1440 = vshrl.u32 %v1439, 7
      %v1441 = vsub.s32 0, %v1440
      %v1442 = vrot.slane %v1437, %v1441
      %v1443 = vlaneseq
      %v1444 = vshrl.u32 %v1443, 7
      %v1445 = vsub.s32 1, %v1444
      %v1446 = vrot.slane %v1437, %v1445
      %v1449 = vmul.f32 %v1428, %v1442
      %v1450 = vmul.f32 %v1432, %v1446
      %v1451 = vmul.f32 %v1429, %v1442
      %v1452 = vmul.f32 %v1433, %v1446
      %v1453 = vmul.f32 %v1430, %v1442
      %v1454 = vmul.f32 %v1434, %v1446
      %v1455 = vmul.f32 %v1431, %v1442
      %v1456 = vmul.f32 %v1435, %v1446
      %v1457 = vadd.f32 %v1403, %v1449
      %v1458 = vadd.f32 %v1404, %v1450
      %v1459 = vadd.f32 %v1405, %v1451
      %v1460 = vadd.f32 %v1406, %v1452
      %v1461 = vadd.f32 %v1407, %v1453
      %v1462 = vadd.f32 %v1408, %v1454
      %v1463 = vadd.f32 %v1409, %v1455
      %v1464 = vadd.f32 %v1410, %v1456
      %1465 = vst [vmem:[%s224] sm:$0xff] %v1457
      %1466 = vst [vmem:[%s224 + $0x8] sm:$0xff] %v1458
      %1467 = vst [vmem:[%s224 + $0x10] sm:$0xff] %v1459
      %1468 = vst [vmem:[%s224 + $0x18] sm:$0xff] %v1460
      %1469 = vst [vmem:[%s224 + $0x20] sm:$0xff] %v1461
      %1470 = vst [vmem:[%s224 + $0x28] sm:$0xff] %v1462
      %1471 = vst [vmem:[%s224 + $0x30] sm:$0xff] %v1463
      %1472 = vst [vmem:[%s224 + $0x38] sm:$0xff] %v1464
      %p1473 = scmp.lt.s32.totalorder %s16, 1
      %s1474 = scalar_select %p1473, %s16, 1
      %s1475 = smul.addr %s1474, 8
      %s1476 = smul.addr %s1475, 8
      %s1477 = scalar_lea.vmem %s5, %s1476
      // Predicated region
      $region41: #{base_dense_layer.3} parent=39 // pred_check
        %p1478 = pneg %p144
      $region42: #{base_dense_layer.3} parent=39 // pred_check_branch
        %1480 = sbr.rel (%p1478) target = $region44
      $region43: #{base_dense_layer.3} parent=39 // pred_region
        _
      $region44: #{base_dense_layer.3} parent=39 // pred_fallthru
        _
    $region40: #{base_dense_layer.3} parent=5 // pred_fallthru
      _
    %p1481 = scmp.le.s32.totalorder 2, %s11
    // Predicated region
    $region45: #{base_dense_layer.3} parent=5 // pred_check
      %p1482 = pneg %p1481
    $region46: #{base_dense_layer.3} parent=5 // pred_check_branch
      %1484 = sbr.rel (%p1482) target = $region48
    $region47: #{base_dense_layer.3} parent=5 // pred_region
      %s1485 = ssub.s32 %s11, 2
      // Predicated region
      $region49: #{base_dense_layer.3} parent=47 // pred_check
        %p1486 = pneg %p150
      $region50: #{base_dense_layer.3} parent=47 // pred_check_branch
        %1488 = sbr.rel (%p1486) target = $region52
      $region51: #{base_dense_layer.3} parent=47 // pred_region
        %p1489 = scmp.lt.s32.totalorder %s17, 1
        %s1490 = scalar_select %p1489, %s17, 1
        %s1491 = smul.addr %s1490, 8
        %s1492 = smul.addr %s1491, 8
        %s1493 = scalar_lea.vmem %s5, %s1492
      $region52: #{base_dense_layer.3} parent=47 // pred_fallthru
        _
    $region48: #{base_dense_layer.3} parent=5 // pred_fallthru
      _
  $region6: #{base_dense_layer.3} parent=0 // loop_footer
    %s15 = sadd.s32 1, %s11
  $region7: #{base_dense_layer.3} parent=0 // loop_footer_branch
    %10 = sbr.rel target = $region3
  $region8: #{base_dense_layer.3} parent=0 // loop_exit
    _

</llo_original>
